<compile_context>
chip_gen: v7x
topology: tpu7x:2x2x1
jax: 0.10.0
libtpu: 0.0.40
codegen_flags: <defaults>
</compile_context>

<pallas_src>
import functools
import math

import jax
import jax.numpy as jnp
from jax import lax
from jax.experimental import pallas as pl
from jax.experimental.pallas import tpu as pltpu


_MASK_VALUE = -1e30   # finite "neg-inf": exp(masked - m) underflows to exactly 0


@functools.lru_cache(maxsize=None)
def _vmem_budget_bytes():
    """~75% of per-core VMEM (48 MiB on v7x, 96 MiB on v5e/v6e); safe fallback 48 MiB."""
    cap = 64 * 1024 * 1024
    try:
        info = pltpu.get_tpu_info()
        cap = int(getattr(info, "vmem_capacity_bytes", cap))
    except Exception:
        pass
    return (cap * 3) // 4


def _pick_tile(dim, candidates):
    """Largest candidate that divides `dim`, else the full dim."""
    for c in candidates:
        if c <= dim and dim % c == 0:
            return c
    return dim


# ----------------------------------------------------------------------------
# Tiled fused Linear: y = x @ W + b
# ----------------------------------------------------------------------------
def _linear_kernel(x_ref, w_ref, b_ref, o_ref, acc_ref):
    k = pl.program_id(2)

    @pl.when(k == 0)
    def _init():
        acc_ref[...] = jnp.zeros_like(acc_ref)

    acc_ref[...] += jnp.dot(x_ref[...], w_ref[...],
                            preferred_element_type=jnp.float32)

    @pl.when(k == pl.num_programs(2) - 1)
    def _finalize():
        o_ref[...] = (acc_ref[...] + b_ref[...].astype(jnp.float32)).astype(o_ref.dtype)


def _linear_tiles(M, N, K, in_dtype, out_dtype, budget):
    isz = jnp.dtype(in_dtype).itemsize
    osz = jnp.dtype(out_dtype).itemsize
    min_tm = 16 if isz < 4 else 8   # bf16 native sublane tile is 16
    tm_cands = [c for c in (2048, 1024, 768, 512, 384, 256, 128, 64, 32, 16, 8)
                if min_tm <= c <= M and M % c == 0] or [M]
    tn_cands = [c for c in (2304, 1536, 1152, 1024, 768, 512, 384, 256, 128)
                if c <= N and N % c == 0] or [N]
    if K <= 2048:
        tk_cands = [K]               # keep the whole contraction resident
    else:
        tk_cands = [c for c in (2048, 1536, 1024, 768, 512, 256, 128)
                    if K % c == 0] or [K]

    def fits(tm, tn, tk):
        need = (2 * (tm * tk + tk * tn) * isz   # double-buffered inputs
                + 2 * tm * tn * osz             # double-buffered output
                + tm * tn * 4                   # fp32 accumulator
                + 2 * tn * isz)                 # bias
        return need <= budget

    choice = None
    for tm in tm_cands:
        for tn in tn_cands:
            for tk in tk_cands:
                if fits(tm, tn, tk):
                    choice = (tm, tn, tk)
                    break
            if choice:
                break
        if choice:
            break
    if choice is None:
        choice = (tm_cands[-1], tn_cands[-1], tk_cands[-1])
    tm, tn, tk = choice

    # v7x megacore: keep the (i, j) parallel extent >= 2 when the shape allows it.
    if (M // tm) * (N // tn) < 2:
        smaller_m = [c for c in tm_cands if c < tm]
        smaller_n = [c for c in tn_cands if c < tn]
        if smaller_m:
            tm = smaller_m[0]
        elif smaller_n:
            tn = smaller_n[0]
    return tm, tn, tk


def linear(x, w, b, out_dtype=None):
    """x: (M, K), w: (K, N), b: (N,) -> (M, N)."""
    M, K = x.shape
    K2, N = w.shape
    assert K == K2 and b.shape == (N,)
    out_dtype = jnp.dtype(out_dtype) if out_dtype is not None else x.dtype

    budget = _vmem_budget_bytes()
    tm, tn, tk = _linear_tiles(M, N, K, x.dtype, out_dtype, budget)
    grid = (M // tm, N // tn, K // tk)
    b2 = b.reshape(1, N)

    return pl.pallas_call(
        _linear_kernel,
        out_shape=jax.ShapeDtypeStruct((M, N), out_dtype),
        grid_spec=pltpu.PrefetchScalarGridSpec(
            num_scalar_prefetch=0,
            grid=grid,
            in_specs=[
                pl.BlockSpec((tm, tk), lambda i, j, k: (i, k)),
                pl.BlockSpec((tk, tn), lambda i, j, k: (k, j)),
                pl.BlockSpec((1, tn), lambda i, j, k: (0, j)),
            ],
            out_specs=pl.BlockSpec((tm, tn), lambda i, j, k: (i, j)),
            scratch_shapes=[pltpu.VMEM((tm, tn), jnp.float32)],
        ),
        compiler_params=pltpu.CompilerParams(
            dimension_semantics=("parallel", "parallel", "arbitrary"),
            vmem_limit_bytes=budget,
        ),
    )(x, w, b2)


# ----------------------------------------------------------------------------
# Flash-style causal attention over a triangular (qi, ki) step axis
# ----------------------------------------------------------------------------
def _flash_attn_kernel(qi_tbl, ki_tbl, q_ref, k_ref, v_ref, o_ref,
                       m_ref, l_ref, acc_ref, *, tq, tk, dh, heads_per_block):
    # q_ref: (tq, P*dh), k_ref/v_ref: (tk, P*dh), o_ref: (tq, P*dh)
    t = pl.program_id(2)
    qi = qi_tbl[t]
    ki = ki_tbl[t]
    q_start = qi * tq
    k_start = ki * tk

    @pl.when(ki == 0)
    def _init():
        m_ref[...] = jnp.full_like(m_ref, _MASK_VALUE)
        l_ref[...] = jnp.zeros_like(l_ref)
        acc_ref[...] = jnp.zeros_like(acc_ref)

    # Causal mask via element offsets (correct for tq != tk).  On tiles fully
    # below the diagonal `col <= row` holds everywhere, so applying it
    # unconditionally keeps a single traced body (lower vreg pressure).
    row = q_start + lax.broadcasted_iota(jnp.int32, (tq, tk), 0)
    col = k_start + lax.broadcasted_iota(jnp.int32, (tq, tk), 1)
    allowed = col <= row

    for h in range(heads_per_block):          # static unroll over packed heads
        lo = h * dh
        q = q_ref[:, lo:lo + dh]              # 1/sqrt(dh) already folded into W_q
        k = k_ref[:, lo:lo + dh]
        v = v_ref[:, lo:lo + dh]
        s = lax.dot_general(q, k, (((1,), (1,)), ((), ())),
                            preferred_element_type=jnp.float32)   # (tq, tk)
        s = jnp.where(allowed, s, _MASK_VALUE)
        m_prev = m_ref[h]
        m_new = jnp.maximum(m_prev, jnp.max(s, axis=-1, keepdims=True))
        alpha = jnp.exp(m_prev - m_new)                           # (tq, 1)
        p = jnp.exp(s - m_new)                                    # fp32 stats
        l_ref[h] = alpha * l_ref[h] + jnp.sum(p, axis=-1, keepdims=True)
        acc_ref[h] = alpha * acc_ref[h] + jnp.dot(
            p.astype(v.dtype), v, preferred_element_type=jnp.float32)
        m_ref[h] = m_new

    last_ki = (q_start + tq - 1) // tk        # last KV tile that this q tile sees

    @pl.when(ki == last_ki)
    def _finalize():
        outs = []
        for h in range(heads_per_block):
            inv = pl.reciprocal(l_ref[h], approx=True)            # EUP, (tq,1) only
            outs.append(acc_ref[h] * inv)
        o = outs[0] if heads_per_block == 1 else jnp.concatenate(outs, axis=-1)
        o_ref[...] = o.astype(o_ref.dtype)


def _flash_attention(qkv, n_head, *, tq=256, tk=128):
    """qkv: (B, T, 3C) from c_attn.  Heads sliced in-kernel.  Returns (B, T, C)."""
    B, T, C3 = qkv.shape
    C = C3 // 3
    Dh = C // n_head

    # Heads-per-128-lane-block packing (GPT-2 Dh=64 -> 2 heads / block).
    if Dh % 128 == 0:
        P = 1
    elif 128 % Dh == 0 and n_head % (128 // Dh) == 0:
        P = 128 // Dh
    else:
        # TODO(synk): generic packing for irregular head_dim / odd n_head.
        raise NotImplementedError(
            f"head_dim={Dh}, n_head={n_head} not supported by the packed attention path")
    bw = P * Dh
    G = n_head // P
    assert C % bw == 0

    tq = _pick_tile(T, tuple(c for c in (512, 384, 256, 128, 64, 32, 16, 8) if c <= tq))
    tk = _pick_tile(T, tuple(c for c in (256, 128, 64, 32, 16, 8) if c <= min(tk, tq)))
    nq = T // tq

    # Triangular step table: only (qi, ki) pairs at/below the diagonal are visited.
    qi_list, ki_list = [], []
    for qi in range(nq):
        last_ki = (qi * tq + tq - 1) // tk
        for ki in range(last_ki + 1):
            qi_list.append(qi)
            ki_list.append(ki)
    qi_tbl = jnp.asarray(qi_list, dtype=jnp.int32)
    ki_tbl = jnp.asarray(ki_list, dtype=jnp.int32)
    n_steps = len(qi_list)

    kernel = functools.partial(_flash_attn_kernel, tq=tq, tk=tk, dh=Dh,
                               heads_per_block=P)

    # Column block index into the 3C axis (block width bw): q group g -> g,
    # k group g -> G + g, v group g -> 2G + g.
    q_spec = pl.BlockSpec((None, tq, bw), lambda b, g, t, qt, kt: (b, qt[t], g))
    k_spec = pl.BlockSpec((None, tk, bw), lambda b, g, t, qt, kt: (b, kt[t], G + g))
    v_spec = pl.BlockSpec((None, tk, bw), lambda b, g, t, qt, kt: (b, kt[t], 2 * G + g))
    o_spec = pl.BlockSpec((None, tq, bw), lambda b, g, t, qt, kt: (b, qt[t], g))

    return pl.pallas_call(
        kernel,
        out_shape=jax.ShapeDtypeStruct((B, T, C), qkv.dtype),
        grid_spec=pltpu.PrefetchScalarGridSpec(
            num_scalar_prefetch=2,
            grid=(B, G, n_steps),
            in_specs=[q_spec, k_spec, v_spec],
            out_specs=o_spec,
            scratch_shapes=[
                pltpu.VMEM((P, tq, 1), jnp.float32),    # running max m (per head)
                pltpu.VMEM((P, tq, 1), jnp.float32),    # running denom l (per head)
                pltpu.VMEM((P, tq, Dh), jnp.float32),   # unnormalized output acc
            ],
        ),
        compiler_params=pltpu.CompilerParams(
            dimension_semantics=("parallel", "parallel", "arbitrary"),
            vmem_limit_bytes=_vmem_budget_bytes(),
        ),
    )(qi_tbl, ki_tbl, qkv, qkv, qkv)


# ----------------------------------------------------------------------------
# Module wrapper: matches CausalSelfAttention.forward
# ----------------------------------------------------------------------------
def causal_self_attention(x, params, n_head, *, compute_dtype=None, tq=256, tk=128):
    """x: (B, T, C) -> (B, T, C).  compute_dtype=jnp.bfloat16 feeds the MXU bf16."""
    B, T, C = x.shape
    assert C % n_head == 0
    Dh = C // n_head
    out_dtype = x.dtype
    cdt = jnp.dtype(compute_dtype) if compute_dtype is not None else x.dtype
    scale = 1.0 / math.sqrt(Dh)

    # Fold 1/sqrt(Dh) into the Q columns of c_attn once (in fp32, then cast),
    # instead of rescaling the resident q tile on every KV step in the kernel.
    w_attn = params["w_attn"].astype(jnp.float32).at[:, :C].multiply(scale).astype(cdt)
    b_attn = params["b_attn"].astype(jnp.float32).at[:C].multiply(scale).astype(cdt)
    w_proj = params["w_proj"].astype(cdt)
    b_proj = params["b_proj"].astype(cdt)
    xc = x.astype(cdt)

    # c_attn: fused QKV projection, (B*T, C) @ (C, 3C) + b
    qkv = linear(xc.reshape(B * T, C), w_attn, b_attn, out_dtype=cdt)
    qkv = qkv.reshape(B, T, 3 * C)

    # Flash attention reads head slices straight out of qkv and writes (B, T, C)
    # directly — no XLA-side split / head transpose HBM round trips.
    y = _flash_attention(qkv, n_head, tq=tq, tk=tk)

    # c_proj
    out = linear(y.reshape(B * T, C), w_proj, b_proj, out_dtype=out_dtype)
    return out.reshape(B, T, C)


def init_params(key, n_embd):
    """nn.Linear-shaped params (weights stored as (in, out))."""
    k1, k2, k3, k4 = jax.random.split(key, 4)
    bound = 1.0 / math.sqrt(n_embd)
    return {
        "w_attn": jax.random.uniform(k1, (n_embd, 3 * n_embd), jnp.float32, -bound, bound),
        "b_attn": jax.random.uniform(k2, (3 * n_embd,), jnp.float32, -bound, bound),
        "w_proj": jax.random.uniform(k3, (n_embd, n_embd), jnp.float32, -bound, bound),
        "b_proj": jax.random.uniform(k4, (n_embd,), jnp.float32, -bound, bound),
    }


def reference(x, params, n_head):
    """Pure-JAX reference (fp32, highest matmul precision)."""
    B, T, C = x.shape
    Dh = C // n_head
    with jax.default_matmul_precision("highest"):
        qkv = x @ params["w_attn"] + params["b_attn"]
        q, k, v = jnp.split(qkv, 3, axis=2)

        def heads(t):
            return t.reshape(B, T, n_head, Dh).transpose(0, 2, 1, 3)

        q, k, v = heads(q), heads(k), heads(v)
        s = jnp.einsum("bhqd,bhkd->bhqk", q, k) / math.sqrt(Dh)
        mask = jnp.tril(jnp.ones((T, T), bool))
        s = jnp.where(mask, s, -jnp.inf)
        p = jax.nn.softmax(s, axis=-1)
        y = jnp.einsum("bhqk,bhkd->bhqd", p, v)
        y = y.transpose(0, 2, 1, 3).reshape(B, T, C)
        return y @ params["w_proj"] + params["b_proj"]


if __name__ == "__main__":
    # Small shapes consistent with the module.  The first config (Dh=64) is the
    # real GPT-2 head size and exercises the 2-heads-per-block packed path; the
    # second exercises Dh=128; the third exercises the bf16 MXU operand path.
    configs = [
        # (B, T, C, n_head, compute_dtype, atol, rtol)
        (2, 256, 128, 2, None,          3e-3, 3e-3),
        (2, 256, 256, 2, None,          3e-3, 3e-3),
        (2, 256, 128, 2, jnp.bfloat16,  1e-1, 1e-1),
    ]
    key = jax.random.PRNGKey(0)
    for (Bsz, T, C, H, cdt, atol, rtol) in configs:
        key, kx, kp = jax.random.split(key, 3)
        x = jax.random.normal(kx, (Bsz, T, C), dtype=jnp.float32)
        params = init_params(kp, C)

        out = causal_self_attention(x, params, n_head=H, compute_dtype=cdt)
        out = jax.block_until_ready(out)

        expected = reference(x, params, H)
        assert out.shape == (Bsz, T, C)
        out32 = out.astype(jnp.float32)
        max_err = float(jnp.max(jnp.abs(out32 - expected)))
        assert jnp.allclose(out32, expected, atol=atol, rtol=rtol), (
            f"mismatch vs reference (B={Bsz}, T={T}, C={C}, H={H}, dtype={cdt}): "
            f"max_err={max_err}")

    print("KERNEL_OK")
</pallas_src>

<mosaic_0001>
module attributes {stable_mosaic.version = 11 : i64} {
  func.func @_linear_kernel(%arg0: i32, %arg1: i32, %arg2: i32, %arg3: memref<256x128xf32, #tpu.memory_space<vmem>>, %arg4: memref<128x384xf32, #tpu.memory_space<vmem>>, %arg5: memref<1x384xf32, #tpu.memory_space<vmem>>, %arg6: memref<256x384xf32, #tpu.memory_space<vmem>>, %arg7: memref<256x384xf32, #tpu.memory_space<vmem>>) attributes {dimension_semantics = [#tpu.dimension_semantics<parallel>, #tpu.dimension_semantics<parallel>, #tpu.dimension_semantics<arbitrary>], iteration_bounds = array<i64: 2, 1, 1>, scalar_prefetch = 0 : i64, scratch_operands = 1 : i64, tpu.core_type = #tpu.core_type<tc>, window_params = [{transform_indices = @transform_0, window_bounds = array<i64: 256, 128>}, {transform_indices = @transform_1, window_bounds = array<i64: 128, 384>}, {transform_indices = @transform_2, window_bounds = array<i64: 1, 384>}, {transform_indices = @transform_3, window_bounds = array<i64: 256, 384>}]} {
    %c0_i32 = arith.constant 0 : i32
    %0 = arith.cmpi eq, %arg2, %c0_i32 : i32
    %1 = arith.extui %0 : i1 to i32
    %c0_i32_0 = arith.constant 0 : i32
    %2 = arith.cmpi ne, %1, %c0_i32_0 : i32
    scf.if %2 {
      %cst_10 = arith.constant 0.000000e+00 : f32
      %12 = vector.broadcast %cst_10 : f32 to vector<256x384xf32>
      %c0_11 = arith.constant 0 : index
      %c0_12 = arith.constant 0 : index
      %13 = vector.load %arg7[%c0_11, %c0_12] : memref<256x384xf32, #tpu.memory_space<vmem>>, vector<256x384xf32>
      tpu.vector_store %arg7[%c0_11, %c0_12], %12 {strides = array<i32>} : memref<256x384xf32, #tpu.memory_space<vmem>>, vector<256x384xf32>,
    } else {
    }
    %c0 = arith.constant 0 : index
    %c0_1 = arith.constant 0 : index
    %3 = vector.load %arg7[%c0, %c0_1] : memref<256x384xf32, #tpu.memory_space<vmem>>, vector<256x384xf32>
    %c0_2 = arith.constant 0 : index
    %c0_3 = arith.constant 0 : index
    %4 = vector.load %arg3[%c0_2, %c0_3] : memref<256x128xf32, #tpu.memory_space<vmem>>, vector<256x128xf32>
    %c0_4 = arith.constant 0 : index
    %c0_5 = arith.constant 0 : index
    %5 = vector.load %arg4[%c0_4, %c0_5] : memref<128x384xf32, #tpu.memory_space<vmem>>, vector<128x384xf32>
    %cst = arith.constant dense<0.000000e+00> : vector<256x384xf32>
    %6 = tpu.matmul %4, %5, %cst {dimension_numbers = #tpu.dot_dimension_numbers<[1], [0], [0], [1], [0, 0, 1, 1], [], []>} : vector<256x128xf32>, vector<128x384xf32>, vector<256x384xf32> -> vector<256x384xf32>
    %7 = arith.addf %3, %6 : vector<256x384xf32>
    %c0_6 = arith.constant 0 : index
    %c0_7 = arith.constant 0 : index
    %8 = vector.load %arg7[%c0_6, %c0_7] : memref<256x384xf32, #tpu.memory_space<vmem>>, vector<256x384xf32>
    tpu.vector_store %arg7[%c0_6, %c0_7], %7 {strides = array<i32>} : memref<256x384xf32, #tpu.memory_space<vmem>>, vector<256x384xf32>,
    %c0_i32_8 = arith.constant 0 : i32
    %9 = arith.cmpi eq, %arg2, %c0_i32_8 : i32
    %10 = arith.extui %9 : i1 to i32
    %c0_i32_9 = arith.constant 0 : i32
    %11 = arith.cmpi ne, %10, %c0_i32_9 : i32
    scf.if %11 {
      %c0_10 = arith.constant 0 : index
      %c0_11 = arith.constant 0 : index
      %12 = vector.load %arg7[%c0_10, %c0_11] : memref<256x384xf32, #tpu.memory_space<vmem>>, vector<256x384xf32>
      %c0_12 = arith.constant 0 : index
      %c0_13 = arith.constant 0 : index
      %13 = vector.load %arg5[%c0_12, %c0_13] : memref<1x384xf32, #tpu.memory_space<vmem>>, vector<1x384xf32>
      %14 = vector.broadcast %13 : vector<1x384xf32> to vector<256x384xf32>
      %15 = arith.addf %12, %14 : vector<256x384xf32>
      %c0_14 = arith.constant 0 : index
      %c0_15 = arith.constant 0 : index
      %16 = vector.load %arg6[%c0_14, %c0_15] : memref<256x384xf32, #tpu.memory_space<vmem>>, vector<256x384xf32>
      tpu.vector_store %arg6[%c0_14, %c0_15], %15 {strides = array<i32>} : memref<256x384xf32, #tpu.memory_space<vmem>>, vector<256x384xf32>,
    } else {
    }
    return
  }
  func.func @transform_0(%arg0: i32, %arg1: i32, %arg2: i32) -> (i32, i32) {
    %c0_i32 = arith.constant 0 : i32
    return %arg0, %arg2 : i32, i32
  }
  func.func @transform_1(%arg0: i32, %arg1: i32, %arg2: i32) -> (i32, i32) {
    %c0_i32 = arith.constant 0 : i32
    return %arg2, %arg1 : i32, i32
  }
  func.func @transform_2(%arg0: i32, %arg1: i32, %arg2: i32) -> (i32, i32) {
    %c0_i32 = arith.constant 0 : i32
    %c0_i32_0 = arith.constant 0 : i32
    return %c0_i32, %arg1 : i32, i32
  }
  func.func @transform_3(%arg0: i32, %arg1: i32, %arg2: i32) -> (i32, i32) {
    %c0_i32 = arith.constant 0 : i32
    return %arg0, %arg1 : i32, i32
  }
}

</mosaic_0001>

<llo_original>
// kernel: tpu_custom_call.1
$region0: #{tpu_custom_call.1}
  #allocation0 [shape = 'u32[]', space=smem, size = 0x4, offset = 0x4, fixed_abs, tag = 'smem constant byte address 0x4 - core index']
  #allocation1 [shape = 'u32[144,128]{1,0:T(1,128)}', space=vmem, size = 0x12000, scoped, tag = 'internal scratch']
  #allocation2 [shape = 'f32[256,384]{1,0:T(8,128)}', space=vmem, size = 0x60000, scoped, tag = 'scratch operand']
  %s0 = inlined_call_operand.hbm [shape: f32[512,128], index: 0, kind: input, shape index: {}]
  %s1 = inlined_call_operand.hbm [shape: f32[128,384], index: 1, kind: input, shape index: {}]
  %s2 = inlined_call_operand.vmem [shape: f32[1,384], index: 2, kind: input, shape index: {}]
  %s3 = inlined_call_operand.hbm [shape: f32[512,384], index: 3, kind: output, shape index: {}]
  %s4 = sld [smem:[#allocation0]]
  $region61: #{tpu_custom_call.1} parent=0
    _
  %s6 = ssub.s32 1, %s4
  %s7 = scalar_select 0, %s6, %s4
  $region1: #{tpu_custom_call.1} parent=0
    #allocation3 [shape = 'u8[262144]{0}', space=vmem, size = 0x40000, scoped, tag = 'input window, operand 0']
    #allocation4 [shape = 's32[2]{0}', space=sflag, size = 0x8, scoped, tag = 'scoped memory for tpu_custom_call.1']
    #allocation5 [shape = 's32[2]{0}', space=sflag, size = 0x8, scoped, tag = 'scoped memory for tpu_custom_call.1']
    #allocation6 [shape = 'u8[196608]{0}', space=vmem, size = 0x30000, scoped, tag = 'input window, operand 1, single buffered']
    #allocation7 [shape = 's32[1]{0}', space=sflag, size = 0x4, scoped, tag = 'scoped memory for tpu_custom_call.1']
    #allocation8 [shape = 'u8[786432]{0}', space=vmem, size = 0xc0000, scoped, tag = 'output window, operand 0']
    %8 = vsyncpa [#allocation4], 0
    %s9 = scalar_lea.sflag [#allocation4], 1
    %10 = vsyncpa %s9, 0
    %11 = vsyncpa [#allocation7], 0
    %12 = vsyncpa [#allocation5], 0
    %s13 = scalar_lea.sflag [#allocation5], 1
    %14 = vsyncpa %s13, 0
    loop: start=0, step=1, limit=4
    $region2: #{tpu_custom_call.1} parent=1 // loop_pre_header
      _
    $region3: #{tpu_custom_call.1} parent=1 // loop_header
      %s16 = sphi 0, %s20
      %p17 = scmp.ge.s32.totalorder %s16, 4
      %s23 = sphi 0, %s42
      %s24 = sphi 0, %s38
      %s25 = sphi 0, %s34
      %s26 = sphi 0, %s23
      %s27 = sphi 0, %s24
      %s28 = sphi 0, %s25
      %s29 = sphi 0, %s26
      %s30 = sphi 0, %s27
      %s31 = sphi 0, %s28
      %s47 = sphi 0, %s49
      %s50 = sphi 0, %s47
      %s51 = sphi 0, %s50
      %s67 = sphi 0, %s51
      %s75 = sphi 0, %s77
      %s78 = sphi 0, %s75
      %s79 = sphi 0, %s78
      %s95 = sphi 0, %s79
      %s101 = sphi 0, %s103
      %s104 = sphi 0, %s101
      %s105 = sphi 0, %s104
      %s121 = sphi 0, %s105
      %s129 = sphi 0, %s131
      %s132 = sphi 0, %s129
      %s133 = sphi 0, %s132
      %s149 = sphi 0, %s133
    $region4: #{tpu_custom_call.1} parent=1 // loop_header_branch
      %19 = sbr.rel (%p17) target = $region8
    $region5: #{tpu_custom_call.1} parent=1 // loop_body
      %s21 = ssub.s32 %s16, 1
      %s22 = ssub.s32 %s16, 2
      %s32 = sadd.s32 1, %s25
      %p33 = scmp.ge.s32.totalorder %s32, 1
      %s34 = scalar_select %p33, 0, %s32
      %s35 = sadd.s32 1, %s24
      %s36 = scalar_select %p33, %s35, %s24
      %p37 = scmp.ge.s32.totalorder %s36, 1
      %s38 = scalar_select %p37, 0, %s36
      %s39 = sadd.s32 1, %s23
      %s40 = scalar_select %p37, %s39, %s23
      %p41 = scmp.ge.s32.totalorder %s40, 2
      %s42 = scalar_select %p41, 0, %s40
      %s43 = ssub.s32 %s23, %s42
      %s44 = ssub.s32 %s25, %s34
      %s45 = sor.u32 %s43, %s44
      %p46 = scmp.eq.s32.totalorder %s45, 0
      %s48 = sadd.s32 %s47, 1
      %s49 = scalar_select %p46, %s47, %s48
      %p52 = pneg %p46
      %p53 = scmp.eq.s32.totalorder %s16, 1
      %p54 = por %p52, %p53
      %p55 = scmp.ne.s32.totalorder %s47, %s50
      %p56 = scmp.eq.s32.totalorder %s16, 0
      %p57 = por %p55, %p56
      %p58 = scmp.ne.s32.totalorder %s47, %s50
      %p59 = scmp.eq.s32.totalorder %s21, 1
      %p60 = por %p58, %p59
      %p61 = scmp.ne.s32.totalorder %s50, %s51
      %p62 = scmp.eq.s32.totalorder %s21, 0
      %p63 = por %p61, %p62
      %p64 = scmp.ne.s32.totalorder %s50, %s51
      %p65 = scmp.eq.s32.totalorder %s22, 1
      %p66 = por %p64, %p65
      %p68 = scmp.ne.s32.totalorder %s51, %s67
      %p69 = scmp.eq.s32.totalorder %s22, 0
      %p70 = por %p68, %p69
      %s71 = ssub.s32 %s25, %s34
      %s72 = ssub.s32 %s24, %s38
      %s73 = sor.u32 %s71, %s72
      %p74 = scmp.eq.s32.totalorder %s73, 0
      %s76 = sadd.s32 %s75, 1
      %s77 = scalar_select %p74, %s75, %s76
      %p80 = pneg %p74
      %p81 = scmp.eq.s32.totalorder %s16, 1
      %p82 = por %p80, %p81
      %p83 = scmp.ne.s32.totalorder %s75, %s78
      %p84 = scmp.eq.s32.totalorder %s16, 0
      %p85 = por %p83, %p84
      %p86 = scmp.ne.s32.totalorder %s75, %s78
      %p87 = scmp.eq.s32.totalorder %s21, 1
      %p88 = por %p86, %p87
      %p89 = scmp.ne.s32.totalorder %s78, %s79
      %p90 = scmp.eq.s32.totalorder %s21, 0
      %p91 = por %p89, %p90
      %p92 = scmp.ne.s32.totalorder %s78, %s79
      %p93 = scmp.eq.s32.totalorder %s22, 1
      %p94 = por %p92, %p93
      %p96 = scmp.ne.s32.totalorder %s79, %s95
      %p97 = scmp.eq.s32.totalorder %s22, 0
      %p98 = por %p96, %p97
      %s99 = ssub.s32 %s24, %s38
      %p100 = scmp.eq.s32.totalorder %s99, 0
      %s102 = sadd.s32 %s101, 1
      %s103 = scalar_select %p100, %s101, %s102
      %p106 = pneg %p100
      %p107 = scmp.eq.s32.totalorder %s16, 1
      %p108 = por %p106, %p107
      %p109 = scmp.ne.s32.totalorder %s101, %s104
      %p110 = scmp.eq.s32.totalorder %s16, 0
      %p111 = por %p109, %p110
      %p112 = scmp.ne.s32.totalorder %s101, %s104
      %p113 = scmp.eq.s32.totalorder %s21, 1
      %p114 = por %p112, %p113
      %p115 = scmp.ne.s32.totalorder %s104, %s105
      %p116 = scmp.eq.s32.totalorder %s21, 0
      %p117 = por %p115, %p116
      %p118 = scmp.ne.s32.totalorder %s104, %s105
      %p119 = scmp.eq.s32.totalorder %s22, 1
      %p120 = por %p118, %p119
      %p122 = scmp.ne.s32.totalorder %s105, %s121
      %p123 = scmp.eq.s32.totalorder %s22, 0
      %p124 = por %p122, %p123
      %s125 = ssub.s32 %s23, %s42
      %s126 = ssub.s32 %s24, %s38
      %s127 = sor.u32 %s125, %s126
      %p128 = scmp.eq.s32.totalorder %s127, 0
      %s130 = sadd.s32 %s129, 1
      %s131 = scalar_select %p128, %s129, %s130
      %p134 = pneg %p128
      %p135 = scmp.eq.s32.totalorder %s16, 1
      %p136 = por %p134, %p135
      %p137 = scmp.ne.s32.totalorder %s129, %s132
      %p138 = scmp.eq.s32.totalorder %s16, 0
      %p139 = por %p137, %p138
      %p140 = scmp.ne.s32.totalorder %s129, %s132
      %p141 = scmp.eq.s32.totalorder %s21, 1
      %p142 = por %p140, %p141
      %p143 = scmp.ne.s32.totalorder %s132, %s133
      %p144 = scmp.eq.s32.totalorder %s21, 0
      %p145 = por %p143, %p144
      %p146 = scmp.ne.s32.totalorder %s132, %s133
      %p147 = scmp.eq.s32.totalorder %s22, 1
      %p148 = por %p146, %p147
      %p150 = scmp.ne.s32.totalorder %s133, %s149
      %p151 = scmp.eq.s32.totalorder %s22, 0
      %p152 = por %p150, %p151
      %p153 = scmp.le.s32.totalorder 1, %s16
      %p154 = scmp.lt.s32.totalorder %s16, 3
      %p155 = pnand %p153, %p154
      %p156 = pneg %p155
      // Predicated region
      $region9: #{tpu_custom_call.1} parent=5 // pred_check
        _
      $region10: #{tpu_custom_call.1} parent=5 // pred_check_branch
        %158 = sbr.rel (%p155) target = $region12
      $region11: #{tpu_custom_call.1} parent=5 // pred_region
        %s159 = ssub.s32 %s16, 1
        // Predicated region
        $region13: #{tpu_custom_call.1} parent=11 // pred_check
          %p160 = pneg %p91
        $region14: #{tpu_custom_call.1} parent=11 // pred_check_branch
          %162 = sbr.rel (%p160) target = $region16
        $region15: #{tpu_custom_call.1} parent=11 // pred_region
          %s163 = smul.u32 16, %s28
          %s164 = smul.u32 3, %s27
          %s166 = ssub.s32 6144, 6144
          %167 = vsyncadd [#allocation7], %s166
          %s168 = smul.addr %s163, 3
          %s169 = sadd.s32 %s164, %s168
          %s170 = smul.addr %s169, 128
          %s171 = scalar_lea.hbm %s1, %s170
          %s172 = sshll.u32 [#allocation6], 4
          %s173 = int_to_ptr.vmem [resolvable:$true] %s172
          %178 = dma.hbm_to_vmem [thread:$0]  %s171, 6144, %s173, [#allocation7], 384, 384, 24
        $region16: #{tpu_custom_call.1} parent=11 // pred_fallthru
          _
        // Predicated region
        $region17: #{tpu_custom_call.1} parent=11 // pred_check
          %p179 = pneg %p117
        $region18: #{tpu_custom_call.1} parent=11 // pred_check_branch
          %181 = sbr.rel (%p179) target = $region20
        $region19: #{tpu_custom_call.1} parent=11 // pred_region
          %s182 = smul.u32 3, %s27
          %p183 = scmp.lt.s32.totalorder %s182, 2
          %s184 = scalar_select %p183, %s182, 2
          %s185 = scalar_lea.vmem %s2, %s184
          %s186 = smul.u32 3, %s27
        $region20: #{tpu_custom_call.1} parent=11 // pred_fallthru
          _
      $region12: #{tpu_custom_call.1} parent=5 // pred_fallthru
        _
      %p187 = scmp.lt.s32.totalorder %s16, 2
      // Predicated region
      $region21: #{tpu_custom_call.1} parent=5 // pred_check
        %p188 = pneg %p187
      $region22: #{tpu_custom_call.1} parent=5 // pred_check_branch
        %190 = sbr.rel (%p188) target = $region24
      $region23: #{tpu_custom_call.1} parent=5 // pred_region
        // Predicated region
        $region25: #{tpu_custom_call.1} parent=23 // pred_check
          %p191 = pneg %p57
        $region26: #{tpu_custom_call.1} parent=23 // pred_check_branch
          %193 = sbr.rel (%p191) target = $region28
        $region27: #{tpu_custom_call.1} parent=23 // pred_region
          %s194 = sand.u32 %s47, 1
          %s195 = scalar_lea.sflag [#allocation4], %s194
          %s196 = sand.u32 %s47, 1
          %s197 = smul.addr %s196, 256
          %s198 = scalar_lea.vmem [#allocation3], %s197
          %s199 = smul.u32 32, %s23
          %s201 = ssub.s32 4096, 4096
          %202 = vsyncadd %s195, %s201
          %s203 = sadd.s32 %s25, %s199
          %s204 = smul.addr %s203, 128
          %s205 = scalar_lea.hbm %s0, %s204
          %s206 = sshll.u32 %s198, 4
          %s207 = int_to_ptr.vmem [resolvable:$true] %s206
          %212 = dma.hbm_to_vmem [thread:$0]  %s205, 4096, %s207, %s195, 128, 128, 8
        $region28: #{tpu_custom_call.1} parent=23 // pred_fallthru
          _
      $region24: #{tpu_custom_call.1} parent=5 // pred_fallthru
        _
      %p213 = scmp.le.s32.totalorder 1, %s16
      %p214 = scmp.lt.s32.totalorder %s16, 3
      %p215 = pnand %p213, %p214
      %p216 = pneg %p215
      // Predicated region
      $region29: #{tpu_custom_call.1} parent=5 // pred_check
        _
      $region30: #{tpu_custom_call.1} parent=5 // pred_check_branch
        %218 = sbr.rel (%p215) target = $region32
      $region31: #{tpu_custom_call.1} parent=5 // pred_region
        %s219 = ssub.s32 %s16, 1
        %s220 = sand.u32 %s50, 1
        %s221 = scalar_lea.sflag [#allocation4], %s220
        %s222 = sand.u32 %s50, 1
        %s223 = smul.addr %s222, 256
        %s224 = scalar_lea.vmem [#allocation3], %s223
        // Predicated region
        $region33: #{tpu_custom_call.1} parent=31 // pred_check
          %p225 = pneg %p63
        $region34: #{tpu_custom_call.1} parent=31 // pred_check_branch
          %227 = sbr.rel (%p225) target = $region36
        $region35: #{tpu_custom_call.1} parent=31 // pred_region
          %228 = dma.done %s221, 4096
        $region36: #{tpu_custom_call.1} parent=31 // pred_fallthru
          _
        // Predicated region
        $region37: #{tpu_custom_call.1} parent=31 // pred_check
          %p229 = pneg %p91
        $region38: #{tpu_custom_call.1} parent=31 // pred_check_branch
          %231 = sbr.rel (%p229) target = $region40
        $region39: #{tpu_custom_call.1} parent=31 // pred_region
          %232 = dma.done [#allocation7], 6144
        $region40: #{tpu_custom_call.1} parent=31 // pred_fallthru
          _
        %s233 = sand.u32 %s50, 1
        %s234 = scalar_lea.sflag [#allocation4], %s233
        %s235 = sand.u32 %s50, 1
        %s236 = smul.addr %s235, 256
        %s237 = scalar_lea.vmem [#allocation3], %s236
        %p238 = pneg %p63
        %p239 = pneg %p60
        %p240 = pneg %p91
        %p241 = pneg %p88
        %s242 = smul.u32 3, %s27
        %p243 = scmp.lt.s32.totalorder %s242, 2
        %s244 = scalar_select %p243, %s242, 2
        %s245 = scalar_lea.vmem %s2, %s244
        %p246 = pneg %p117
        %p247 = pneg %p114
        %p248 = pneg %p145
        %p249 = pneg %p142
        %s250 = sand.u32 %s132, 1
        %s251 = scalar_lea.sflag [#allocation5], %s250
        %s252 = sand.u32 %s132, 1
        %s253 = smul.addr %s252, 768
        %s254 = scalar_lea.vmem [#allocation8], %s253
        %s255 = smul.u32 32, %s26
        %s256 = smul.u32 16, %s28
        %s257 = smul.u32 3, %s27
        %s258 = smul.u32 3, %s27
        %p259 = scmp.lt.s32.totalorder %s258, 2
        %s260 = scalar_select %p259, %s258, 2
        %s261 = scalar_lea.vmem %s2, %s260
        %s262 = smul.u32 3, %s27
        %s263 = smul.u32 32, %s26
        %s264 = smul.u32 3, %s27
        %p265 = scmp.eq.s32.totalorder %s28, 0
        // Predicated region
        $region41: #{tpu_custom_call.1} parent=31 // pred_check
          %p266 = pneg %p265
        $region42: #{tpu_custom_call.1} parent=31 // pred_check_branch
          %268 = sbr.rel (%p266) target = $region44
        $region43: #{tpu_custom_call.1} parent=31 // pred_region
          %269 = vst [vmem:[#allocation2] sm:$0xff] 0.0
          %270 = vst [vmem:[#allocation2 + $0x8] sm:$0xff] 0.0
          %271 = vst [vmem:[#allocation2 + $0x10] sm:$0xff] 0.0
          %272 = vst [vmem:[#allocation2 + $0x18] sm:$0xff] 0.0
          %273 = vst [vmem:[#allocation2 + $0x20] sm:$0xff] 0.0
          %274 = vst [vmem:[#allocation2 + $0x28] sm:$0xff] 0.0
          %275 = vst [vmem:[#allocation2 + $0x30] sm:$0xff] 0.0
          %276 = vst [vmem:[#allocation2 + $0x38] sm:$0xff] 0.0
          %277 = vst [vmem:[#allocation2 + $0x40] sm:$0xff] 0.0
          %278 = vst [vmem:[#allocation2 + $0x48] sm:$0xff] 0.0
          %279 = vst [vmem:[#allocation2 + $0x50] sm:$0xff] 0.0
          %280 = vst [vmem:[#allocation2 + $0x58] sm:$0xff] 0.0
          %281 = vst [vmem:[#allocation2 + $0x60] sm:$0xff] 0.0
          %282 = vst [vmem:[#allocation2 + $0x68] sm:$0xff] 0.0
          %283 = vst [vmem:[#allocation2 + $0x70] sm:$0xff] 0.0
          %284 = vst [vmem:[#allocation2 + $0x78] sm:$0xff] 0.0
          %285 = vst [vmem:[#allocation2 + $0x80] sm:$0xff] 0.0
          %286 = vst [vmem:[#allocation2 + $0x88] sm:$0xff] 0.0
          %287 = vst [vmem:[#allocation2 + $0x90] sm:$0xff] 0.0
          %288 = vst [vmem:[#allocation2 + $0x98] sm:$0xff] 0.0
          %289 = vst [vmem:[#allocation2 + $0xa0] sm:$0xff] 0.0
          %290 = vst [vmem:[#allocation2 + $0xa8] sm:$0xff] 0.0
          %291 = vst [vmem:[#allocation2 + $0xb0] sm:$0xff] 0.0
          %292 = vst [vmem:[#allocation2 + $0xb8] sm:$0xff] 0.0
          %293 = vst [vmem:[#allocation2 + $0xc0] sm:$0xff] 0.0
          %294 = vst [vmem:[#allocation2 + $0xc8] sm:$0xff] 0.0
          %295 = vst [vmem:[#allocation2 + $0xd0] sm:$0xff] 0.0
          %296 = vst [vmem:[#allocation2 + $0xd8] sm:$0xff] 0.0
          %297 = vst [vmem:[#allocation2 + $0xe0] sm:$0xff] 0.0
          %298 = vst [vmem:[#allocation2 + $0xe8] sm:$0xff] 0.0
          %299 = vst [vmem:[#allocation2 + $0xf0] sm:$0xff] 0.0
          %300 = vst [vmem:[#allocation2 + $0xf8] sm:$0xff] 0.0
          %301 = vst [vmem:[#allocation2 + $0x100] sm:$0xff] 0.0
          %302 = vst [vmem:[#allocation2 + $0x108] sm:$0xff] 0.0
          %303 = vst [vmem:[#allocation2 + $0x110] sm:$0xff] 0.0
          %304 = vst [vmem:[#allocation2 + $0x118] sm:$0xff] 0.0
          %305 = vst [vmem:[#allocation2 + $0x120] sm:$0xff] 0.0
          %306 = vst [vmem:[#allocation2 + $0x128] sm:$0xff] 0.0
          %307 = vst [vmem:[#allocation2 + $0x130] sm:$0xff] 0.0
          %308 = vst [vmem:[#allocation2 + $0x138] sm:$0xff] 0.0
          %309 = vst [vmem:[#allocation2 + $0x140] sm:$0xff] 0.0
          %310 = vst [vmem:[#allocation2 + $0x148] sm:$0xff] 0.0
          %311 = vst [vmem:[#allocation2 + $0x150] sm:$0xff] 0.0
          %312 = vst [vmem:[#allocation2 + $0x158] sm:$0xff] 0.0
          %313 = vst [vmem:[#allocation2 + $0x160] sm:$0xff] 0.0
          %314 = vst [vmem:[#allocation2 + $0x168] sm:$0xff] 0.0
          %315 = vst [vmem:[#allocation2 + $0x170] sm:$0xff] 0.0
          %316 = vst [vmem:[#allocation2 + $0x178] sm:$0xff] 0.0
          %317 = vst [vmem:[#allocation2 + $0x180] sm:$0xff] 0.0
          %318 = vst [vmem:[#allocation2 + $0x188] sm:$0xff] 0.0
          %319 = vst [vmem:[#allocation2 + $0x190] sm:$0xff] 0.0
          %320 = vst [vmem:[#allocation2 + $0x198] sm:$0xff] 0.0
          %321 = vst [vmem:[#allocation2 + $0x1a0] sm:$0xff] 0.0
          %322 = vst [vmem:[#allocation2 + $0x1a8] sm:$0xff] 0.0
          %323 = vst [vmem:[#allocation2 + $0x1b0] sm:$0xff] 0.0
          %324 = vst [vmem:[#allocation2 + $0x1b8] sm:$0xff] 0.0
          %325 = vst [vmem:[#allocation2 + $0x1c0] sm:$0xff] 0.0
          %326 = vst [vmem:[#allocation2 + $0x1c8] sm:$0xff] 0.0
          %327 = vst [vmem:[#allocation2 + $0x1d0] sm:$0xff] 0.0
          %328 = vst [vmem:[#allocation2 + $0x1d8] sm:$0xff] 0.0
          %329 = vst [vmem:[#allocation2 + $0x1e0] sm:$0xff] 0.0
          %330 = vst [vmem:[#allocation2 + $0x1e8] sm:$0xff] 0.0
          %331 = vst [vmem:[#allocation2 + $0x1f0] sm:$0xff] 0.0
          %332 = vst [vmem:[#allocation2 + $0x1f8] sm:$0xff] 0.0
          %333 = vst [vmem:[#allocation2 + $0x200] sm:$0xff] 0.0
          %334 = vst [vmem:[#allocation2 + $0x208] sm:$0xff] 0.0
          %335 = vst [vmem:[#allocation2 + $0x210] sm:$0xff] 0.0
          %336 = vst [vmem:[#allocation2 + $0x218] sm:$0xff] 0.0
          %337 = vst [vmem:[#allocation2 + $0x220] sm:$0xff] 0.0
          %338 = vst [vmem:[#allocation2 + $0x228] sm:$0xff] 0.0
          %339 = vst [vmem:[#allocation2 + $0x230] sm:$0xff] 0.0
          %340 = vst [vmem:[#allocation2 + $0x238] sm:$0xff] 0.0
          %341 = vst [vmem:[#allocation2 + $0x240] sm:$0xff] 0.0
          %342 = vst [vmem:[#allocation2 + $0x248] sm:$0xff] 0.0
          %343 = vst [vmem:[#allocation2 + $0x250] sm:$0xff] 0.0
          %344 = vst [vmem:[#allocation2 + $0x258] sm:$0xff] 0.0
          %345 = vst [vmem:[#allocation2 + $0x260] sm:$0xff] 0.0
          %346 = vst [vmem:[#allocation2 + $0x268] sm:$0xff] 0.0
          %347 = vst [vmem:[#allocation2 + $0x270] sm:$0xff] 0.0
          %348 = vst [vmem:[#allocation2 + $0x278] sm:$0xff] 0.0
          %349 = vst [vmem:[#allocation2 + $0x280] sm:$0xff] 0.0
          %350 = vst [vmem:[#allocation2 + $0x288] sm:$0xff] 0.0
          %351 = vst [vmem:[#allocation2 + $0x290] sm:$0xff] 0.0
          %352 = vst [vmem:[#allocation2 + $0x298] sm:$0xff] 0.0
          %353 = vst [vmem:[#allocation2 + $0x2a0] sm:$0xff] 0.0
          %354 = vst [vmem:[#allocation2 + $0x2a8] sm:$0xff] 0.0
          %355 = vst [vmem:[#allocation2 + $0x2b0] sm:$0xff] 0.0
          %356 = vst [vmem:[#allocation2 + $0x2b8] sm:$0xff] 0.0
          %357 = vst [vmem:[#allocation2 + $0x2c0] sm:$0xff] 0.0
          %358 = vst [vmem:[#allocation2 + $0x2c8] sm:$0xff] 0.0
          %359 = vst [vmem:[#allocation2 + $0x2d0] sm:$0xff] 0.0
          %360 = vst [vmem:[#allocation2 + $0x2d8] sm:$0xff] 0.0
          %361 = vst [vmem:[#allocation2 + $0x2e0] sm:$0xff] 0.0
          %362 = vst [vmem:[#allocation2 + $0x2e8] sm:$0xff] 0.0
          %363 = vst [vmem:[#allocation2 + $0x2f0] sm:$0xff] 0.0
          %364 = vst [vmem:[#allocation2 + $0x2f8] sm:$0xff] 0.0
        $region44: #{tpu_custom_call.1} parent=31 // pred_fallthru
          _
        %v365 = vld [vmem:[#allocation2] sm:$0xff]
        %v366 = vld [vmem:[#allocation2 + $0x8] sm:$0xff]
        %v367 = vld [vmem:[#allocation2 + $0x10] sm:$0xff]
        %v368 = vld [vmem:[#allocation2 + $0x18] sm:$0xff]
        %v369 = vld [vmem:[#allocation2 + $0x20] sm:$0xff]
        %v370 = vld [vmem:[#allocation2 + $0x28] sm:$0xff]
        %v371 = vld [vmem:[#allocation2 + $0x30] sm:$0xff]
        %v372 = vld [vmem:[#allocation2 + $0x38] sm:$0xff]
        %v373 = vld [vmem:[#allocation2 + $0x40] sm:$0xff]
        %v374 = vld [vmem:[#allocation2 + $0x48] sm:$0xff]
        %v375 = vld [vmem:[#allocation2 + $0x50] sm:$0xff]
        %v376 = vld [vmem:[#allocation2 + $0x58] sm:$0xff]
        %v377 = vld [vmem:[#allocation2 + $0x60] sm:$0xff]
        %v378 = vld [vmem:[#allocation2 + $0x68] sm:$0xff]
        %v379 = vld [vmem:[#allocation2 + $0x70] sm:$0xff]
        %v380 = vld [vmem:[#allocation2 + $0x78] sm:$0xff]
        %v381 = vld [vmem:[#allocation2 + $0x80] sm:$0xff]
        %v382 = vld [vmem:[#allocation2 + $0x88] sm:$0xff]
        %v383 = vld [vmem:[#allocation2 + $0x90] sm:$0xff]
        %v384 = vld [vmem:[#allocation2 + $0x98] sm:$0xff]
        %v385 = vld [vmem:[#allocation2 + $0xa0] sm:$0xff]
        %v386 = vld [vmem:[#allocation2 + $0xa8] sm:$0xff]
        %v387 = vld [vmem:[#allocation2 + $0xb0] sm:$0xff]
        %v388 = vld [vmem:[#allocation2 + $0xb8] sm:$0xff]
        %v389 = vld [vmem:[#allocation2 + $0xc0] sm:$0xff]
        %v390 = vld [vmem:[#allocation2 + $0xc8] sm:$0xff]
        %v391 = vld [vmem:[#allocation2 + $0xd0] sm:$0xff]
        %v392 = vld [vmem:[#allocation2 + $0xd8] sm:$0xff]
        %v393 = vld [vmem:[#allocation2 + $0xe0] sm:$0xff]
        %v394 = vld [vmem:[#allocation2 + $0xe8] sm:$0xff]
        %v395 = vld [vmem:[#allocation2 + $0xf0] sm:$0xff]
        %v396 = vld [vmem:[#allocation2 + $0xf8] sm:$0xff]
        %v397 = vld [vmem:[#allocation2 + $0x100] sm:$0xff]
        %v398 = vld [vmem:[#allocation2 + $0x108] sm:$0xff]
        %v399 = vld [vmem:[#allocation2 + $0x110] sm:$0xff]
        %v400 = vld [vmem:[#allocation2 + $0x118] sm:$0xff]
        %v401 = vld [vmem:[#allocation2 + $0x120] sm:$0xff]
        %v402 = vld [vmem:[#allocation2 + $0x128] sm:$0xff]
        %v403 = vld [vmem:[#allocation2 + $0x130] sm:$0xff]
        %v404 = vld [vmem:[#allocation2 + $0x138] sm:$0xff]
        %v405 = vld [vmem:[#allocation2 + $0x140] sm:$0xff]
        %v406 = vld [vmem:[#allocation2 + $0x148] sm:$0xff]
        %v407 = vld [vmem:[#allocation2 + $0x150] sm:$0xff]
        %v408 = vld [vmem:[#allocation2 + $0x158] sm:$0xff]
        %v409 = vld [vmem:[#allocation2 + $0x160] sm:$0xff]
        %v410 = vld [vmem:[#allocation2 + $0x168] sm:$0xff]
        %v411 = vld [vmem:[#allocation2 + $0x170] sm:$0xff]
        %v412 = vld [vmem:[#allocation2 + $0x178] sm:$0xff]
        %v413 = vld [vmem:[#allocation2 + $0x180] sm:$0xff]
        %v414 = vld [vmem:[#allocation2 + $0x188] sm:$0xff]
        %v415 = vld [vmem:[#allocation2 + $0x190] sm:$0xff]
        %v416 = vld [vmem:[#allocation2 + $0x198] sm:$0xff]
        %v417 = vld [vmem:[#allocation2 + $0x1a0] sm:$0xff]
        %v418 = vld [vmem:[#allocation2 + $0x1a8] sm:$0xff]
        %v419 = vld [vmem:[#allocation2 + $0x1b0] sm:$0xff]
        %v420 = vld [vmem:[#allocation2 + $0x1b8] sm:$0xff]
        %v421 = vld [vmem:[#allocation2 + $0x1c0] sm:$0xff]
        %v422 = vld [vmem:[#allocation2 + $0x1c8] sm:$0xff]
        %v423 = vld [vmem:[#allocation2 + $0x1d0] sm:$0xff]
        %v424 = vld [vmem:[#allocation2 + $0x1d8] sm:$0xff]
        %v425 = vld [vmem:[#allocation2 + $0x1e0] sm:$0xff]
        %v426 = vld [vmem:[#allocation2 + $0x1e8] sm:$0xff]
        %v427 = vld [vmem:[#allocation2 + $0x1f0] sm:$0xff]
        %v428 = vld [vmem:[#allocation2 + $0x1f8] sm:$0xff]
        %v429 = vld [vmem:[#allocation2 + $0x200] sm:$0xff]
        %v430 = vld [vmem:[#allocation2 + $0x208] sm:$0xff]
        %v431 = vld [vmem:[#allocation2 + $0x210] sm:$0xff]
        %v432 = vld [vmem:[#allocation2 + $0x218] sm:$0xff]
        %v433 = vld [vmem:[#allocation2 + $0x220] sm:$0xff]
        %v434 = vld [vmem:[#allocation2 + $0x228] sm:$0xff]
        %v435 = vld [vmem:[#allocation2 + $0x230] sm:$0xff]
        %v436 = vld [vmem:[#allocation2 + $0x238] sm:$0xff]
        %v437 = vld [vmem:[#allocation2 + $0x240] sm:$0xff]
        %v438 = vld [vmem:[#allocation2 + $0x248] sm:$0xff]
        %v439 = vld [vmem:[#allocation2 + $0x250] sm:$0xff]
        %v440 = vld [vmem:[#allocation2 + $0x258] sm:$0xff]
        %v441 = vld [vmem:[#allocation2 + $0x260] sm:$0xff]
        %v442 = vld [vmem:[#allocation2 + $0x268] sm:$0xff]
        %v443 = vld [vmem:[#allocation2 + $0x270] sm:$0xff]
        %v444 = vld [vmem:[#allocation2 + $0x278] sm:$0xff]
        %v445 = vld [vmem:[#allocation2 + $0x280] sm:$0xff]
        %v446 = vld [vmem:[#allocation2 + $0x288] sm:$0xff]
        %v447 = vld [vmem:[#allocation2 + $0x290] sm:$0xff]
        %v448 = vld [vmem:[#allocation2 + $0x298] sm:$0xff]
        %v449 = vld [vmem:[#allocation2 + $0x2a0] sm:$0xff]
        %v450 = vld [vmem:[#allocation2 + $0x2a8] sm:$0xff]
        %v451 = vld [vmem:[#allocation2 + $0x2b0] sm:$0xff]
        %v452 = vld [vmem:[#allocation2 + $0x2b8] sm:$0xff]
        %v453 = vld [vmem:[#allocation2 + $0x2c0] sm:$0xff]
        %v454 = vld [vmem:[#allocation2 + $0x2c8] sm:$0xff]
        %v455 = vld [vmem:[#allocation2 + $0x2d0] sm:$0xff]
        %v456 = vld [vmem:[#allocation2 + $0x2d8] sm:$0xff]
        %v457 = vld [vmem:[#allocation2 + $0x2e0] sm:$0xff]
        %v458 = vld [vmem:[#allocation2 + $0x2e8] sm:$0xff]
        %v459 = vld [vmem:[#allocation2 + $0x2f0] sm:$0xff]
        %v460 = vld [vmem:[#allocation2 + $0x2f8] sm:$0xff]
        %v461 = vld [vmem:[%s224] sm:$0xff]
        %v462 = vld [vmem:[%s224 + $0x8] sm:$0xff]
        %v463 = vld [vmem:[%s224 + $0x10] sm:$0xff]
        %v464 = vld [vmem:[%s224 + $0x18] sm:$0xff]
        %v465 = vld [vmem:[%s224 + $0x20] sm:$0xff]
        %v466 = vld [vmem:[%s224 + $0x28] sm:$0xff]
        %v467 = vld [vmem:[%s224 + $0x30] sm:$0xff]
        %v468 = vld [vmem:[%s224 + $0x38] sm:$0xff]
        %v469 = vld [vmem:[%s224 + $0x40] sm:$0xff]
        %v470 = vld [vmem:[%s224 + $0x48] sm:$0xff]
        %v471 = vld [vmem:[%s224 + $0x50] sm:$0xff]
        %v472 = vld [vmem:[%s224 + $0x58] sm:$0xff]
        %v473 = vld [vmem:[%s224 + $0x60] sm:$0xff]
        %v474 = vld [vmem:[%s224 + $0x68] sm:$0xff]
        %v475 = vld [vmem:[%s224 + $0x70] sm:$0xff]
        %v476 = vld [vmem:[%s224 + $0x78] sm:$0xff]
        %v477 = vld [vmem:[%s224 + $0x80] sm:$0xff]
        %v478 = vld [vmem:[%s224 + $0x88] sm:$0xff]
        %v479 = vld [vmem:[%s224 + $0x90] sm:$0xff]
        %v480 = vld [vmem:[%s224 + $0x98] sm:$0xff]
        %v481 = vld [vmem:[%s224 + $0xa0] sm:$0xff]
        %v482 = vld [vmem:[%s224 + $0xa8] sm:$0xff]
        %v483 = vld [vmem:[%s224 + $0xb0] sm:$0xff]
        %v484 = vld [vmem:[%s224 + $0xb8] sm:$0xff]
        %v485 = vld [vmem:[%s224 + $0xc0] sm:$0xff]
        %v486 = vld [vmem:[%s224 + $0xc8] sm:$0xff]
        %v487 = vld [vmem:[%s224 + $0xd0] sm:$0xff]
        %v488 = vld [vmem:[%s224 + $0xd8] sm:$0xff]
        %v489 = vld [vmem:[%s224 + $0xe0] sm:$0xff]
        %v490 = vld [vmem:[%s224 + $0xe8] sm:$0xff]
        %v491 = vld [vmem:[%s224 + $0xf0] sm:$0xff]
        %v492 = vld [vmem:[%s224 + $0xf8] sm:$0xff]
        %v493 = vld [vmem:[#allocation6] sm:$0xff]
        %v494 = vld [vmem:[#allocation6 + $0x8] sm:$0xff]
        %v495 = vld [vmem:[#allocation6 + $0x10] sm:$0xff]
        %v496 = vld [vmem:[#allocation6 + $0x18] sm:$0xff]
        %v497 = vld [vmem:[#allocation6 + $0x20] sm:$0xff]
        %v498 = vld [vmem:[#allocation6 + $0x28] sm:$0xff]
        %v499 = vld [vmem:[#allocation6 + $0x30] sm:$0xff]
        %v500 = vld [vmem:[#allocation6 + $0x38] sm:$0xff]
        %v501 = vld [vmem:[#allocation6 + $0x40] sm:$0xff]
        %v502 = vld [vmem:[#allocation6 + $0x48] sm:$0xff]
        %v503 = vld [vmem:[#allocation6 + $0x50] sm:$0xff]
        %v504 = vld [vmem:[#allocation6 + $0x58] sm:$0xff]
        %v505 = vld [vmem:[#allocation6 + $0x60] sm:$0xff]
        %v506 = vld [vmem:[#allocation6 + $0x68] sm:$0xff]
        %v507 = vld [vmem:[#allocation6 + $0x70] sm:$0xff]
        %v508 = vld [vmem:[#allocation6 + $0x78] sm:$0xff]
        %v509 = vld [vmem:[#allocation6 + $0x80] sm:$0xff]
        %v510 = vld [vmem:[#allocation6 + $0x88] sm:$0xff]
        %v511 = vld [vmem:[#allocation6 + $0x90] sm:$0xff]
        %v512 = vld [vmem:[#allocation6 + $0x98] sm:$0xff]
        %v513 = vld [vmem:[#allocation6 + $0xa0] sm:$0xff]
        %v514 = vld [vmem:[#allocation6 + $0xa8] sm:$0xff]
        %v515 = vld [vmem:[#allocation6 + $0xb0] sm:$0xff]
        %v516 = vld [vmem:[#allocation6 + $0xb8] sm:$0xff]
        %v517 = vld [vmem:[#allocation6 + $0xc0] sm:$0xff]
        %v518 = vld [vmem:[#allocation6 + $0xc8] sm:$0xff]
        %v519 = vld [vmem:[#allocation6 + $0xd0] sm:$0xff]
        %v520 = vld [vmem:[#allocation6 + $0xd8] sm:$0xff]
        %v521 = vld [vmem:[#allocation6 + $0xe0] sm:$0xff]
        %v522 = vld [vmem:[#allocation6 + $0xe8] sm:$0xff]
        %v523 = vld [vmem:[#allocation6 + $0xf0] sm:$0xff]
        %v524 = vld [vmem:[#allocation6 + $0xf8] sm:$0xff]
        %v525 = vld [vmem:[#allocation6 + $0x100] sm:$0xff]
        %v526 = vld [vmem:[#allocation6 + $0x108] sm:$0xff]
        %v527 = vld [vmem:[#allocation6 + $0x110] sm:$0xff]
        %v528 = vld [vmem:[#allocation6 + $0x118] sm:$0xff]
        %v529 = vld [vmem:[#allocation6 + $0x120] sm:$0xff]
        %v530 = vld [vmem:[#allocation6 + $0x128] sm:$0xff]
        %v531 = vld [vmem:[#allocation6 + $0x130] sm:$0xff]
        %v532 = vld [vmem:[#allocation6 + $0x138] sm:$0xff]
        %v533 = vld [vmem:[#allocation6 + $0x140] sm:$0xff]
        %v534 = vld [vmem:[#allocation6 + $0x148] sm:$0xff]
        %v535 = vld [vmem:[#allocation6 + $0x150] sm:$0xff]
        %v536 = vld [vmem:[#allocation6 + $0x158] sm:$0xff]
        %v537 = vld [vmem:[#allocation6 + $0x160] sm:$0xff]
        %v538 = vld [vmem:[#allocation6 + $0x168] sm:$0xff]
        %v539 = vld [vmem:[#allocation6 + $0x170] sm:$0xff]
        %v540 = vld [vmem:[#allocation6 + $0x178] sm:$0xff]
        %541 = vmatprep.subr.mxu0 %v494
        %542 = vmatpush1.msra.mxu0 %v493
        %543 = vmatprep.subr.mxu0 %v497
        %544 = vmatpush1.msra.mxu0 %v496
        %545 = vmatprep.subr.mxu0 %v500
        %546 = vmatpush1.msra.mxu0 %v499
        %547 = vmatprep.subr.mxu0 %v503
        %548 = vmatpush1.msra.mxu0 %v502
        %549 = vmatprep.subr.mxu0 %v506
        %550 = vmatpush1.msra.mxu0 %v505
        %551 = vmatprep.subr.mxu0 %v509
        %552 = vmatpush1.msra.mxu0 %v508
        %553 = vmatprep.subr.mxu0 %v512
        %554 = vmatpush1.msra.mxu0 %v511
        %555 = vmatprep.subr.mxu0 %v515
        %556 = vmatpush1.msra.mxu0 %v514
        %557 = vmatprep.subr.mxu0 %v518
        %558 = vmatpush1.msra.mxu0 %v517
        %559 = vmatprep.subr.mxu0 %v521
        %560 = vmatpush1.msra.mxu0 %v520
        %561 = vmatprep.subr.mxu0 %v524
        %562 = vmatpush1.msra.mxu0 %v523
        %563 = vmatprep.subr.mxu0 %v527
        %564 = vmatpush1.msra.mxu0 %v526
        %565 = vmatprep.subr.mxu0 %v530
        %566 = vmatpush1.msra.mxu0 %v529
        %567 = vmatprep.subr.mxu0 %v533
        %568 = vmatpush1.msra.mxu0 %v532
        %569 = vmatprep.subr.mxu0 %v536
        %570 = vmatpush1.msra.mxu0 %v535
        %571 = vmatprep.subr.mxu0 %v539
        %572 = vmatpush1.msra.mxu0 %v538
        %573 = vmatprep.subr.mxu0 0.0
        %574 = vmatpush1.msra.mxu0 0.0
        %575 = vmatprep.subr.mxu0 0.0
        %576 = vmatpush1.msra.mxu0 0.0
        %577 = vmatprep.subr.mxu0 0.0
        %578 = vmatpush1.msra.mxu0 0.0
        %579 = vmatprep.subr.mxu0 0.0
        %580 = vmatpush1.msra.mxu0 0.0
        %581 = vmatprep.subr.mxu0 0.0
        %582 = vmatpush1.msra.mxu0 0.0
        %583 = vmatprep.subr.mxu0 0.0
        %584 = vmatpush1.msra.mxu0 0.0
        %585 = vmatprep.subr.mxu0 0.0
        %586 = vmatpush1.msra.mxu0 0.0
        %587 = vmatprep.subr.mxu0 0.0
        %588 = vmatpush1.msra.mxu0 0.0
        %589 = vmatprep.subr.mxu0 0.0
        %590 = vmatpush1.msra.mxu0 0.0
        %591 = vmatprep.subr.mxu0 0.0
        %592 = vmatpush1.msra.mxu0 0.0
        %593 = vmatprep.subr.mxu0 0.0
        %594 = vmatpush1.msra.mxu0 0.0
        %595 = vmatprep.subr.mxu0 0.0
        %596 = vmatpush1.msra.mxu0 0.0
        %597 = vmatprep.subr.mxu0 0.0
        %598 = vmatpush1.msra.mxu0 0.0
        %599 = vmatprep.subr.mxu0 0.0
        %600 = vmatpush1.msra.mxu0 0.0
        %601 = vmatprep.subr.mxu0 0.0
        %602 = vmatpush1.msra.mxu0 0.0
        %603 = vmatprep.subr.mxu0 0.0
        %604 = vmatpush1.msra.mxu0 0.0
        %605 = vmatprep.mubr.f32.mxu0 0.0
        %606 = vmatmul.mubr.f32.gmra.mrb[0].mxu0 %v461
        %v607 = vpop.f32.mrb[0].mxu0
        %v608 = vadd.f32 0.0, %v607
        %v609 = vpop.f32.mrb[0].mxu0
        %v610 = vadd.f32 0.0, %v609
        %611 = vmatprep.mubr.f32.mxu0 0.0
        %612 = vmatmul.mubr.f32.gmra.mrb[0].mxu0 %v462
        %v613 = vpop.f32.mrb[0].mxu0
        %v614 = vadd.f32 0.0, %v613
        %v615 = vpop.f32.mrb[0].mxu0
        %v616 = vadd.f32 0.0, %v615
        %617 = vmatprep.mubr.f32.mxu0 0.0
        %618 = vmatmul.mubr.f32.gmra.mrb[0].mxu0 %v463
        %v619 = vpop.f32.mrb[0].mxu0
        %v620 = vadd.f32 0.0, %v619
        %v621 = vpop.f32.mrb[0].mxu0
        %v622 = vadd.f32 0.0, %v621
        %623 = vmatprep.mubr.f32.mxu0 0.0
        %624 = vmatmul.mubr.f32.gmra.mrb[0].mxu0 %v464
        %v625 = vpop.f32.mrb[0].mxu0
        %v626 = vadd.f32 0.0, %v625
        %v627 = vpop.f32.mrb[0].mxu0
        %v628 = vadd.f32 0.0, %v627
        %629 = vmatprep.mubr.f32.mxu0 0.0
        %630 = vmatmul.mubr.f32.gmra.mrb[0].mxu0 %v465
        %v631 = vpop.f32.mrb[0].mxu0
        %v632 = vadd.f32 0.0, %v631
        %v633 = vpop.f32.mrb[0].mxu0
        %v634 = vadd.f32 0.0, %v633
        %635 = vmatprep.mubr.f32.mxu0 0.0
        %636 = vmatmul.mubr.f32.gmra.mrb[0].mxu0 %v466
        %v637 = vpop.f32.mrb[0].mxu0
        %v638 = vadd.f32 0.0, %v637
        %v639 = vpop.f32.mrb[0].mxu0
        %v640 = vadd.f32 0.0, %v639
        %641 = vmatprep.mubr.f32.mxu0 0.0
        %642 = vmatmul.mubr.f32.gmra.mrb[0].mxu0 %v467
        %v643 = vpop.f32.mrb[0].mxu0
        %v644 = vadd.f32 0.0, %v643
        %v645 = vpop.f32.mrb[0].mxu0
        %v646 = vadd.f32 0.0, %v645
        %647 = vmatprep.mubr.f32.mxu0 0.0
        %648 = vmatmul.mubr.f32.gmra.mrb[0].mxu0 %v468
        %v649 = vpop.f32.mrb[0].mxu0
        %v650 = vadd.f32 0.0, %v649
        %v651 = vpop.f32.mrb[0].mxu0
        %v652 = vadd.f32 0.0, %v651
        %653 = vmatprep.mubr.f32.mxu0 0.0
        %654 = vmatmul.mubr.f32.gmra.mrb[0].mxu0 %v469
        %v655 = vpop.f32.mrb[0].mxu0
        %v656 = vadd.f32 0.0, %v655
        %v657 = vpop.f32.mrb[0].mxu0
        %v658 = vadd.f32 0.0, %v657
        %659 = vmatprep.mubr.f32.mxu0 0.0
        %660 = vmatmul.mubr.f32.gmra.mrb[0].mxu0 %v470
        %v661 = vpop.f32.mrb[0].mxu0
        %v662 = vadd.f32 0.0, %v661
        %v663 = vpop.f32.mrb[0].mxu0
        %v664 = vadd.f32 0.0, %v663
        %665 = vmatprep.mubr.f32.mxu0 0.0
        %666 = vmatmul.mubr.f32.gmra.mrb[0].mxu0 %v471
        %v667 = vpop.f32.mrb[0].mxu0
        %v668 = vadd.f32 0.0, %v667
        %v669 = vpop.f32.mrb[0].mxu0
        %v670 = vadd.f32 0.0, %v669
        %671 = vmatprep.mubr.f32.mxu0 0.0
        %672 = vmatmul.mubr.f32.gmra.mrb[0].mxu0 %v472
        %v673 = vpop.f32.mrb[0].mxu0
        %v674 = vadd.f32 0.0, %v673
        %v675 = vpop.f32.mrb[0].mxu0
        %v676 = vadd.f32 0.0, %v675
        %677 = vmatprep.mubr.f32.mxu0 0.0
        %678 = vmatmul.mubr.f32.gmra.mrb[0].mxu0 %v473
        %v679 = vpop.f32.mrb[0].mxu0
        %v680 = vadd.f32 0.0, %v679
        %v681 = vpop.f32.mrb[0].mxu0
        %v682 = vadd.f32 0.0, %v681
        %683 = vmatprep.mubr.f32.mxu0 0.0
        %684 = vmatmul.mubr.f32.gmra.mrb[0].mxu0 %v474
        %v685 = vpop.f32.mrb[0].mxu0
        %v686 = vadd.f32 0.0, %v685
        %v687 = vpop.f32.mrb[0].mxu0
        %v688 = vadd.f32 0.0, %v687
        %689 = vmatprep.mubr.f32.mxu0 0.0
        %690 = vmatmul.mubr.f32.gmra.mrb[0].mxu0 %v475
        %v691 = vpop.f32.mrb[0].mxu0
        %v692 = vadd.f32 0.0, %v691
        %v693 = vpop.f32.mrb[0].mxu0
        %v694 = vadd.f32 0.0, %v693
        %695 = vmatprep.mubr.f32.mxu0 0.0
        %696 = vmatmul.mubr.f32.gmra.mrb[0].mxu0 %v476
        %v697 = vpop.f32.mrb[0].mxu0
        %v698 = vadd.f32 0.0, %v697
        %v699 = vpop.f32.mrb[0].mxu0
        %v700 = vadd.f32 0.0, %v699
        %701 = vmatprep.mubr.f32.mxu0 0.0
        %702 = vmatmul.mubr.f32.gmra.mrb[0].mxu0 %v477
        %v703 = vpop.f32.mrb[0].mxu0
        %v704 = vadd.f32 0.0, %v703
        %v705 = vpop.f32.mrb[0].mxu0
        %v706 = vadd.f32 0.0, %v705
        %707 = vmatprep.mubr.f32.mxu0 0.0
        %708 = vmatmul.mubr.f32.gmra.mrb[0].mxu0 %v478
        %v709 = vpop.f32.mrb[0].mxu0
        %v710 = vadd.f32 0.0, %v709
        %v711 = vpop.f32.mrb[0].mxu0
        %v712 = vadd.f32 0.0, %v711
        %713 = vmatprep.mubr.f32.mxu0 0.0
        %714 = vmatmul.mubr.f32.gmra.mrb[0].mxu0 %v479
        %v715 = vpop.f32.mrb[0].mxu0
        %v716 = vadd.f32 0.0, %v715
        %v717 = vpop.f32.mrb[0].mxu0
        %v718 = vadd.f32 0.0, %v717
        %719 = vmatprep.mubr.f32.mxu0 0.0
        %720 = vmatmul.mubr.f32.gmra.mrb[0].mxu0 %v480
        %v721 = vpop.f32.mrb[0].mxu0
        %v722 = vadd.f32 0.0, %v721
        %v723 = vpop.f32.mrb[0].mxu0
        %v724 = vadd.f32 0.0, %v723
        %725 = vmatprep.mubr.f32.mxu0 0.0
        %726 = vmatmul.mubr.f32.gmra.mrb[0].mxu0 %v481
        %v727 = vpop.f32.mrb[0].mxu0
        %v728 = vadd.f32 0.0, %v727
        %v729 = vpop.f32.mrb[0].mxu0
        %v730 = vadd.f32 0.0, %v729
        %731 = vmatprep.mubr.f32.mxu0 0.0
        %732 = vmatmul.mubr.f32.gmra.mrb[0].mxu0 %v482
        %v733 = vpop.f32.mrb[0].mxu0
        %v734 = vadd.f32 0.0, %v733
        %v735 = vpop.f32.mrb[0].mxu0
        %v736 = vadd.f32 0.0, %v735
        %737 = vmatprep.mubr.f32.mxu0 0.0
        %738 = vmatmul.mubr.f32.gmra.mrb[0].mxu0 %v483
        %v739 = vpop.f32.mrb[0].mxu0
        %v740 = vadd.f32 0.0, %v739
        %v741 = vpop.f32.mrb[0].mxu0
        %v742 = vadd.f32 0.0, %v741
        %743 = vmatprep.mubr.f32.mxu0 0.0
        %744 = vmatmul.mubr.f32.gmra.mrb[0].mxu0 %v484
        %v745 = vpop.f32.mrb[0].mxu0
        %v746 = vadd.f32 0.0, %v745
        %v747 = vpop.f32.mrb[0].mxu0
        %v748 = vadd.f32 0.0, %v747
        %749 = vmatprep.mubr.f32.mxu0 0.0
        %750 = vmatmul.mubr.f32.gmra.mrb[0].mxu0 %v485
        %v751 = vpop.f32.mrb[0].mxu0
        %v752 = vadd.f32 0.0, %v751
        %v753 = vpop.f32.mrb[0].mxu0
        %v754 = vadd.f32 0.0, %v753
        %755 = vmatprep.mubr.f32.mxu0 0.0
        %756 = vmatmul.mubr.f32.gmra.mrb[0].mxu0 %v486
        %v757 = vpop.f32.mrb[0].mxu0
        %v758 = vadd.f32 0.0, %v757
        %v759 = vpop.f32.mrb[0].mxu0
        %v760 = vadd.f32 0.0, %v759
        %761 = vmatprep.mubr.f32.mxu0 0.0
        %762 = vmatmul.mubr.f32.gmra.mrb[0].mxu0 %v487
        %v763 = vpop.f32.mrb[0].mxu0
        %v764 = vadd.f32 0.0, %v763
        %v765 = vpop.f32.mrb[0].mxu0
        %v766 = vadd.f32 0.0, %v765
        %767 = vmatprep.mubr.f32.mxu0 0.0
        %768 = vmatmul.mubr.f32.gmra.mrb[0].mxu0 %v488
        %v769 = vpop.f32.mrb[0].mxu0
        %v770 = vadd.f32 0.0, %v769
        %v771 = vpop.f32.mrb[0].mxu0
        %v772 = vadd.f32 0.0, %v771
        %773 = vmatprep.mubr.f32.mxu0 0.0
        %774 = vmatmul.mubr.f32.gmra.mrb[0].mxu0 %v489
        %v775 = vpop.f32.mrb[0].mxu0
        %v776 = vadd.f32 0.0, %v775
        %v777 = vpop.f32.mrb[0].mxu0
        %v778 = vadd.f32 0.0, %v777
        %779 = vmatprep.mubr.f32.mxu0 0.0
        %780 = vmatmul.mubr.f32.gmra.mrb[0].mxu0 %v490
        %v781 = vpop.f32.mrb[0].mxu0
        %v782 = vadd.f32 0.0, %v781
        %v783 = vpop.f32.mrb[0].mxu0
        %v784 = vadd.f32 0.0, %v783
        %785 = vmatprep.mubr.f32.mxu0 0.0
        %786 = vmatmul.mubr.f32.gmra.mrb[0].mxu0 %v491
        %v787 = vpop.f32.mrb[0].mxu0
        %v788 = vadd.f32 0.0, %v787
        %v789 = vpop.f32.mrb[0].mxu0
        %v790 = vadd.f32 0.0, %v789
        %791 = vmatprep.mubr.f32.mxu0 0.0
        %792 = vmatmul.mubr.f32.gmra.mrb[0].mxu0 %v492
        %v793 = vpop.f32.mrb[0].mxu0
        %v794 = vadd.f32 0.0, %v793
        %v795 = vpop.f32.mrb[0].mxu0
        %v796 = vadd.f32 0.0, %v795
        %797 = vdwg.mxu0
        %798 = vmatprep.subr.mxu0 0.0
        %799 = vmatpush1.msra.mxu0 %v495
        %800 = vmatprep.subr.mxu0 0.0
        %801 = vmatpush1.msra.mxu0 %v498
        %802 = vmatprep.subr.mxu0 0.0
        %803 = vmatpush1.msra.mxu0 %v501
        %804 = vmatprep.subr.mxu0 0.0
        %805 = vmatpush1.msra.mxu0 %v504
        %806 = vmatprep.subr.mxu0 0.0
        %807 = vmatpush1.msra.mxu0 %v507
        %808 = vmatprep.subr.mxu0 0.0
        %809 = vmatpush1.msra.mxu0 %v510
        %810 = vmatprep.subr.mxu0 0.0
        %811 = vmatpush1.msra.mxu0 %v513
        %812 = vmatprep.subr.mxu0 0.0
        %813 = vmatpush1.msra.mxu0 %v516
        %814 = vmatprep.subr.mxu0 0.0
        %815 = vmatpush1.msra.mxu0 %v519
        %816 = vmatprep.subr.mxu0 0.0
        %817 = vmatpush1.msra.mxu0 %v522
        %818 = vmatprep.subr.mxu0 0.0
        %819 = vmatpush1.msra.mxu0 %v525
        %820 = vmatprep.subr.mxu0 0.0
        %821 = vmatpush1.msra.mxu0 %v528
        %822 = vmatprep.subr.mxu0 0.0
        %823 = vmatpush1.msra.mxu0 %v531
        %824 = vmatprep.subr.mxu0 0.0
        %825 = vmatpush1.msra.mxu0 %v534
        %826 = vmatprep.subr.mxu0 0.0
        %827 = vmatpush1.msra.mxu0 %v537
        %828 = vmatprep.subr.mxu0 0.0
        %829 = vmatpush1.msra.mxu0 %v540
        %830 = vmatprep.subr.mxu0 0.0
        %831 = vmatpush1.msra.mxu0 0.0
        %832 = vmatprep.subr.mxu0 0.0
        %833 = vmatpush1.msra.mxu0 0.0
        %834 = vmatprep.subr.mxu0 0.0
        %835 = vmatpush1.msra.mxu0 0.0
        %836 = vmatprep.subr.mxu0 0.0
        %837 = vmatpush1.msra.mxu0 0.0
        %838 = vmatprep.subr.mxu0 0.0
        %839 = vmatpush1.msra.mxu0 0.0
        %840 = vmatprep.subr.mxu0 0.0
        %841 = vmatpush1.msra.mxu0 0.0
        %842 = vmatprep.subr.mxu0 0.0
        %843 = vmatpush1.msra.mxu0 0.0
        %844 = vmatprep.subr.mxu0 0.0
        %845 = vmatpush1.msra.mxu0 0.0
        %846 = vmatprep.subr.mxu0 0.0
        %847 = vmatpush1.msra.mxu0 0.0
        %848 = vmatprep.subr.mxu0 0.0
        %849 = vmatpush1.msra.mxu0 0.0
        %850 = vmatprep.subr.mxu0 0.0
        %851 = vmatpush1.msra.mxu0 0.0
        %852 = vmatprep.subr.mxu0 0.0
        %853 = vmatpush1.msra.mxu0 0.0
        %854 = vmatprep.subr.mxu0 0.0
        %855 = vmatpush1.msra.mxu0 0.0
        %856 = vmatprep.subr.mxu0 0.0
        %857 = vmatpush1.msra.mxu0 0.0
        %858 = vmatprep.subr.mxu0 0.0
        %859 = vmatpush1.msra.mxu0 0.0
        %860 = vmatprep.subr.mxu0 0.0
        %861 = vmatpush1.msra.mxu0 0.0
        %862 = vmatprep.mubr.f32.mxu0 0.0
        %863 = vmatmul.mubr.f32.gmra.mrb[0].mxu0 %v461
        %v864 = vpop.f32.mrb[0].mxu0
        %v865 = vadd.f32 0.0, %v864
        %v866 = vpop.f32.mrb[0].mxu0
        %867 = vmatprep.mubr.f32.mxu0 0.0
        %868 = vmatmul.mubr.f32.gmra.mrb[0].mxu0 %v462
        %v869 = vpop.f32.mrb[0].mxu0
        %v870 = vadd.f32 0.0, %v869
        %v871 = vpop.f32.mrb[0].mxu0
        %872 = vmatprep.mubr.f32.mxu0 0.0
        %873 = vmatmul.mubr.f32.gmra.mrb[0].mxu0 %v463
        %v874 = vpop.f32.mrb[0].mxu0
        %v875 = vadd.f32 0.0, %v874
        %v876 = vpop.f32.mrb[0].mxu0
        %877 = vmatprep.mubr.f32.mxu0 0.0
        %878 = vmatmul.mubr.f32.gmra.mrb[0].mxu0 %v464
        %v879 = vpop.f32.mrb[0].mxu0
        %v880 = vadd.f32 0.0, %v879
        %v881 = vpop.f32.mrb[0].mxu0
        %882 = vmatprep.mubr.f32.mxu0 0.0
        %883 = vmatmul.mubr.f32.gmra.mrb[0].mxu0 %v465
        %v884 = vpop.f32.mrb[0].mxu0
        %v885 = vadd.f32 0.0, %v884
        %v886 = vpop.f32.mrb[0].mxu0
        %887 = vmatprep.mubr.f32.mxu0 0.0
        %888 = vmatmul.mubr.f32.gmra.mrb[0].mxu0 %v466
        %v889 = vpop.f32.mrb[0].mxu0
        %v890 = vadd.f32 0.0, %v889
        %v891 = vpop.f32.mrb[0].mxu0
        %892 = vmatprep.mubr.f32.mxu0 0.0
        %893 = vmatmul.mubr.f32.gmra.mrb[0].mxu0 %v467
        %v894 = vpop.f32.mrb[0].mxu0
        %v895 = vadd.f32 0.0, %v894
        %v896 = vpop.f32.mrb[0].mxu0
        %897 = vmatprep.mubr.f32.mxu0 0.0
        %898 = vmatmul.mubr.f32.gmra.mrb[0].mxu0 %v468
        %v899 = vpop.f32.mrb[0].mxu0
        %v900 = vadd.f32 0.0, %v899
        %v901 = vpop.f32.mrb[0].mxu0
        %902 = vmatprep.mubr.f32.mxu0 0.0
        %903 = vmatmul.mubr.f32.gmra.mrb[0].mxu0 %v469
        %v904 = vpop.f32.mrb[0].mxu0
        %v905 = vadd.f32 0.0, %v904
        %v906 = vpop.f32.mrb[0].mxu0
        %907 = vmatprep.mubr.f32.mxu0 0.0
        %908 = vmatmul.mubr.f32.gmra.mrb[0].mxu0 %v470
        %v909 = vpop.f32.mrb[0].mxu0
        %v910 = vadd.f32 0.0, %v909
        %v911 = vpop.f32.mrb[0].mxu0
        %912 = vmatprep.mubr.f32.mxu0 0.0
        %913 = vmatmul.mubr.f32.gmra.mrb[0].mxu0 %v471
        %v914 = vpop.f32.mrb[0].mxu0
        %v915 = vadd.f32 0.0, %v914
        %v916 = vpop.f32.mrb[0].mxu0
        %917 = vmatprep.mubr.f32.mxu0 0.0
        %918 = vmatmul.mubr.f32.gmra.mrb[0].mxu0 %v472
        %v919 = vpop.f32.mrb[0].mxu0
        %v920 = vadd.f32 0.0, %v919
        %v921 = vpop.f32.mrb[0].mxu0
        %922 = vmatprep.mubr.f32.mxu0 0.0
        %923 = vmatmul.mubr.f32.gmra.mrb[0].mxu0 %v473
        %v924 = vpop.f32.mrb[0].mxu0
        %v925 = vadd.f32 0.0, %v924
        %v926 = vpop.f32.mrb[0].mxu0
        %927 = vmatprep.mubr.f32.mxu0 0.0
        %928 = vmatmul.mubr.f32.gmra.mrb[0].mxu0 %v474
        %v929 = vpop.f32.mrb[0].mxu0
        %v930 = vadd.f32 0.0, %v929
        %v931 = vpop.f32.mrb[0].mxu0
        %932 = vmatprep.mubr.f32.mxu0 0.0
        %933 = vmatmul.mubr.f32.gmra.mrb[0].mxu0 %v475
        %v934 = vpop.f32.mrb[0].mxu0
        %v935 = vadd.f32 0.0, %v934
        %v936 = vpop.f32.mrb[0].mxu0
        %937 = vmatprep.mubr.f32.mxu0 0.0
        %938 = vmatmul.mubr.f32.gmra.mrb[0].mxu0 %v476
        %v939 = vpop.f32.mrb[0].mxu0
        %v940 = vadd.f32 0.0, %v939
        %v941 = vpop.f32.mrb[0].mxu0
        %942 = vmatprep.mubr.f32.mxu0 0.0
        %943 = vmatmul.mubr.f32.gmra.mrb[0].mxu0 %v477
        %v944 = vpop.f32.mrb[0].mxu0
        %v945 = vadd.f32 0.0, %v944
        %v946 = vpop.f32.mrb[0].mxu0
        %947 = vmatprep.mubr.f32.mxu0 0.0
        %948 = vmatmul.mubr.f32.gmra.mrb[0].mxu0 %v478
        %v949 = vpop.f32.mrb[0].mxu0
        %v950 = vadd.f32 0.0, %v949
        %v951 = vpop.f32.mrb[0].mxu0
        %952 = vmatprep.mubr.f32.mxu0 0.0
        %953 = vmatmul.mubr.f32.gmra.mrb[0].mxu0 %v479
        %v954 = vpop.f32.mrb[0].mxu0
        %v955 = vadd.f32 0.0, %v954
        %v956 = vpop.f32.mrb[0].mxu0
        %957 = vmatprep.mubr.f32.mxu0 0.0
        %958 = vmatmul.mubr.f32.gmra.mrb[0].mxu0 %v480
        %v959 = vpop.f32.mrb[0].mxu0
        %v960 = vadd.f32 0.0, %v959
        %v961 = vpop.f32.mrb[0].mxu0
        %962 = vmatprep.mubr.f32.mxu0 0.0
        %963 = vmatmul.mubr.f32.gmra.mrb[0].mxu0 %v481
        %v964 = vpop.f32.mrb[0].mxu0
        %v965 = vadd.f32 0.0, %v964
        %v966 = vpop.f32.mrb[0].mxu0
        %967 = vmatprep.mubr.f32.mxu0 0.0
        %968 = vmatmul.mubr.f32.gmra.mrb[0].mxu0 %v482
        %v969 = vpop.f32.mrb[0].mxu0
        %v970 = vadd.f32 0.0, %v969
        %v971 = vpop.f32.mrb[0].mxu0
        %972 = vmatprep.mubr.f32.mxu0 0.0
        %973 = vmatmul.mubr.f32.gmra.mrb[0].mxu0 %v483
        %v974 = vpop.f32.mrb[0].mxu0
        %v975 = vadd.f32 0.0, %v974
        %v976 = vpop.f32.mrb[0].mxu0
        %977 = vmatprep.mubr.f32.mxu0 0.0
        %978 = vmatmul.mubr.f32.gmra.mrb[0].mxu0 %v484
        %v979 = vpop.f32.mrb[0].mxu0
        %v980 = vadd.f32 0.0, %v979
        %v981 = vpop.f32.mrb[0].mxu0
        %982 = vmatprep.mubr.f32.mxu0 0.0
        %983 = vmatmul.mubr.f32.gmra.mrb[0].mxu0 %v485
        %v984 = vpop.f32.mrb[0].mxu0
        %v985 = vadd.f32 0.0, %v984
        %v986 = vpop.f32.mrb[0].mxu0
        %987 = vmatprep.mubr.f32.mxu0 0.0
        %988 = vmatmul.mubr.f32.gmra.mrb[0].mxu0 %v486
        %v989 = vpop.f32.mrb[0].mxu0
        %v990 = vadd.f32 0.0, %v989
        %v991 = vpop.f32.mrb[0].mxu0
        %992 = vmatprep.mubr.f32.mxu0 0.0
        %993 = vmatmul.mubr.f32.gmra.mrb[0].mxu0 %v487
        %v994 = vpop.f32.mrb[0].mxu0
        %v995 = vadd.f32 0.0, %v994
        %v996 = vpop.f32.mrb[0].mxu0
        %997 = vmatprep.mubr.f32.mxu0 0.0
        %998 = vmatmul.mubr.f32.gmra.mrb[0].mxu0 %v488
        %v999 = vpop.f32.mrb[0].mxu0
        %v1000 = vadd.f32 0.0, %v999
        %v1001 = vpop.f32.mrb[0].mxu0
        %1002 = vmatprep.mubr.f32.mxu0 0.0
        %1003 = vmatmul.mubr.f32.gmra.mrb[0].mxu0 %v489
        %v1004 = vpop.f32.mrb[0].mxu0
        %v1005 = vadd.f32 0.0, %v1004
        %v1006 = vpop.f32.mrb[0].mxu0
        %1007 = vmatprep.mubr.f32.mxu0 0.0
        %1008 = vmatmul.mubr.f32.gmra.mrb[0].mxu0 %v490
        %v1009 = vpop.f32.mrb[0].mxu0
        %v1010 = vadd.f32 0.0, %v1009
        %v1011 = vpop.f32.mrb[0].mxu0
        %1012 = vmatprep.mubr.f32.mxu0 0.0
        %1013 = vmatmul.mubr.f32.gmra.mrb[0].mxu0 %v491
        %v1014 = vpop.f32.mrb[0].mxu0
        %v1015 = vadd.f32 0.0, %v1014
        %v1016 = vpop.f32.mrb[0].mxu0
        %1017 = vmatprep.mubr.f32.mxu0 0.0
        %1018 = vmatmul.mubr.f32.gmra.mrb[0].mxu0 %v492
        %v1019 = vpop.f32.mrb[0].mxu0
        %v1020 = vadd.f32 0.0, %v1019
        %v1021 = vpop.f32.mrb[0].mxu0
        %1022 = vdwg.mxu0
        %v1023 = vadd.f32 %v365, %v608
        %v1024 = vadd.f32 %v366, %v610
        %v1025 = vadd.f32 %v367, %v865
        %v1026 = vadd.f32 %v368, %v614
        %v1027 = vadd.f32 %v369, %v616
        %v1028 = vadd.f32 %v370, %v870
        %v1029 = vadd.f32 %v371, %v620
        %v1030 = vadd.f32 %v372, %v622
        %v1031 = vadd.f32 %v373, %v875
        %v1032 = vadd.f32 %v374, %v626
        %v1033 = vadd.f32 %v375, %v628
        %v1034 = vadd.f32 %v376, %v880
        %v1035 = vadd.f32 %v377, %v632
        %v1036 = vadd.f32 %v378, %v634
        %v1037 = vadd.f32 %v379, %v885
        %v1038 = vadd.f32 %v380, %v638
        %v1039 = vadd.f32 %v381, %v640
        %v1040 = vadd.f32 %v382, %v890
        %v1041 = vadd.f32 %v383, %v644
        %v1042 = vadd.f32 %v384, %v646
        %v1043 = vadd.f32 %v385, %v895
        %v1044 = vadd.f32 %v386, %v650
        %v1045 = vadd.f32 %v387, %v652
        %v1046 = vadd.f32 %v388, %v900
        %v1047 = vadd.f32 %v389, %v656
        %v1048 = vadd.f32 %v390, %v658
        %v1049 = vadd.f32 %v391, %v905
        %v1050 = vadd.f32 %v392, %v662
        %v1051 = vadd.f32 %v393, %v664
        %v1052 = vadd.f32 %v394, %v910
        %v1053 = vadd.f32 %v395, %v668
        %v1054 = vadd.f32 %v396, %v670
        %v1055 = vadd.f32 %v397, %v915
        %v1056 = vadd.f32 %v398, %v674
        %v1057 = vadd.f32 %v399, %v676
        %v1058 = vadd.f32 %v400, %v920
        %v1059 = vadd.f32 %v401, %v680
        %v1060 = vadd.f32 %v402, %v682
        %v1061 = vadd.f32 %v403, %v925
        %v1062 = vadd.f32 %v404, %v686
        %v1063 = vadd.f32 %v405, %v688
        %v1064 = vadd.f32 %v406, %v930
        %v1065 = vadd.f32 %v407, %v692
        %v1066 = vadd.f32 %v408, %v694
        %v1067 = vadd.f32 %v409, %v935
        %v1068 = vadd.f32 %v410, %v698
        %v1069 = vadd.f32 %v411, %v700
        %v1070 = vadd.f32 %v412, %v940
        %v1071 = vadd.f32 %v413, %v704
        %v1072 = vadd.f32 %v414, %v706
        %v1073 = vadd.f32 %v415, %v945
        %v1074 = vadd.f32 %v416, %v710
        %v1075 = vadd.f32 %v417, %v712
        %v1076 = vadd.f32 %v418, %v950
        %v1077 = vadd.f32 %v419, %v716
        %v1078 = vadd.f32 %v420, %v718
        %v1079 = vadd.f32 %v421, %v955
        %v1080 = vadd.f32 %v422, %v722
        %v1081 = vadd.f32 %v423, %v724
        %v1082 = vadd.f32 %v424, %v960
        %v1083 = vadd.f32 %v425, %v728
        %v1084 = vadd.f32 %v426, %v730
        %v1085 = vadd.f32 %v427, %v965
        %v1086 = vadd.f32 %v428, %v734
        %v1087 = vadd.f32 %v429, %v736
        %v1088 = vadd.f32 %v430, %v970
        %v1089 = vadd.f32 %v431, %v740
        %v1090 = vadd.f32 %v432, %v742
        %v1091 = vadd.f32 %v433, %v975
        %v1092 = vadd.f32 %v434, %v746
        %v1093 = vadd.f32 %v435, %v748
        %v1094 = vadd.f32 %v436, %v980
        %v1095 = vadd.f32 %v437, %v752
        %v1096 = vadd.f32 %v438, %v754
        %v1097 = vadd.f32 %v439, %v985
        %v1098 = vadd.f32 %v440, %v758
        %v1099 = vadd.f32 %v441, %v760
        %v1100 = vadd.f32 %v442, %v990
        %v1101 = vadd.f32 %v443, %v764
        %v1102 = vadd.f32 %v444, %v766
        %v1103 = vadd.f32 %v445, %v995
        %v1104 = vadd.f32 %v446, %v770
        %v1105 = vadd.f32 %v447, %v772
        %v1106 = vadd.f32 %v448, %v1000
        %v1107 = vadd.f32 %v449, %v776
        %v1108 = vadd.f32 %v450, %v778
        %v1109 = vadd.f32 %v451, %v1005
        %v1110 = vadd.f32 %v452, %v782
        %v1111 = vadd.f32 %v453, %v784
        %v1112 = vadd.f32 %v454, %v1010
        %v1113 = vadd.f32 %v455, %v788
        %v1114 = vadd.f32 %v456, %v790
        %v1115 = vadd.f32 %v457, %v1015
        %v1116 = vadd.f32 %v458, %v794
        %v1117 = vadd.f32 %v459, %v796
        %v1118 = vadd.f32 %v460, %v1020
        %1119 = vst [vmem:[#allocation2] sm:$0xff] %v1023
        %1120 = vst [vmem:[#allocation2 + $0x8] sm:$0xff] %v1024
        %1121 = vst [vmem:[#allocation2 + $0x10] sm:$0xff] %v1025
        %1122 = vst [vmem:[#allocation2 + $0x18] sm:$0xff] %v1026
        %1123 = vst [vmem:[#allocation2 + $0x20] sm:$0xff] %v1027
        %1124 = vst [vmem:[#allocation2 + $0x28] sm:$0xff] %v1028
        %1125 = vst [vmem:[#allocation2 + $0x30] sm:$0xff] %v1029
        %1126 = vst [vmem:[#allocation2 + $0x38] sm:$0xff] %v1030
        %1127 = vst [vmem:[#allocation2 + $0x40] sm:$0xff] %v1031
        %1128 = vst [vmem:[#allocation2 + $0x48] sm:$0xff] %v1032
        %1129 = vst [vmem:[#allocation2 + $0x50] sm:$0xff] %v1033
        %1130 = vst [vmem:[#allocation2 + $0x58] sm:$0xff] %v1034
        %1131 = vst [vmem:[#allocation2 + $0x60] sm:$0xff] %v1035
        %1132 = vst [vmem:[#allocation2 + $0x68] sm:$0xff] %v1036
        %1133 = vst [vmem:[#allocation2 + $0x70] sm:$0xff] %v1037
        %1134 = vst [vmem:[#allocation2 + $0x78] sm:$0xff] %v1038
        %1135 = vst [vmem:[#allocation2 + $0x80] sm:$0xff] %v1039
        %1136 = vst [vmem:[#allocation2 + $0x88] sm:$0xff] %v1040
        %1137 = vst [vmem:[#allocation2 + $0x90] sm:$0xff] %v1041
        %1138 = vst [vmem:[#allocation2 + $0x98] sm:$0xff] %v1042
        %1139 = vst [vmem:[#allocation2 + $0xa0] sm:$0xff] %v1043
        %1140 = vst [vmem:[#allocation2 + $0xa8] sm:$0xff] %v1044
        %1141 = vst [vmem:[#allocation2 + $0xb0] sm:$0xff] %v1045
        %1142 = vst [vmem:[#allocation2 + $0xb8] sm:$0xff] %v1046
        %1143 = vst [vmem:[#allocation2 + $0xc0] sm:$0xff] %v1047
        %1144 = vst [vmem:[#allocation2 + $0xc8] sm:$0xff] %v1048
        %1145 = vst [vmem:[#allocation2 + $0xd0] sm:$0xff] %v1049
        %1146 = vst [vmem:[#allocation2 + $0xd8] sm:$0xff] %v1050
        %1147 = vst [vmem:[#allocation2 + $0xe0] sm:$0xff] %v1051
        %1148 = vst [vmem:[#allocation2 + $0xe8] sm:$0xff] %v1052
        %1149 = vst [vmem:[#allocation2 + $0xf0] sm:$0xff] %v1053
        %1150 = vst [vmem:[#allocation2 + $0xf8] sm:$0xff] %v1054
        %1151 = vst [vmem:[#allocation2 + $0x100] sm:$0xff] %v1055
        %1152 = vst [vmem:[#allocation2 + $0x108] sm:$0xff] %v1056
        %1153 = vst [vmem:[#allocation2 + $0x110] sm:$0xff] %v1057
        %1154 = vst [vmem:[#allocation2 + $0x118] sm:$0xff] %v1058
        %1155 = vst [vmem:[#allocation2 + $0x120] sm:$0xff] %v1059
        %1156 = vst [vmem:[#allocation2 + $0x128] sm:$0xff] %v1060
        %1157 = vst [vmem:[#allocation2 + $0x130] sm:$0xff] %v1061
        %1158 = vst [vmem:[#allocation2 + $0x138] sm:$0xff] %v1062
        %1159 = vst [vmem:[#allocation2 + $0x140] sm:$0xff] %v1063
        %1160 = vst [vmem:[#allocation2 + $0x148] sm:$0xff] %v1064
        %1161 = vst [vmem:[#allocation2 + $0x150] sm:$0xff] %v1065
        %1162 = vst [vmem:[#allocation2 + $0x158] sm:$0xff] %v1066
        %1163 = vst [vmem:[#allocation2 + $0x160] sm:$0xff] %v1067
        %1164 = vst [vmem:[#allocation2 + $0x168] sm:$0xff] %v1068
        %1165 = vst [vmem:[#allocation2 + $0x170] sm:$0xff] %v1069
        %1166 = vst [vmem:[#allocation2 + $0x178] sm:$0xff] %v1070
        %1167 = vst [vmem:[#allocation2 + $0x180] sm:$0xff] %v1071
        %1168 = vst [vmem:[#allocation2 + $0x188] sm:$0xff] %v1072
        %1169 = vst [vmem:[#allocation2 + $0x190] sm:$0xff] %v1073
        %1170 = vst [vmem:[#allocation2 + $0x198] sm:$0xff] %v1074
        %1171 = vst [vmem:[#allocation2 + $0x1a0] sm:$0xff] %v1075
        %1172 = vst [vmem:[#allocation2 + $0x1a8] sm:$0xff] %v1076
        %1173 = vst [vmem:[#allocation2 + $0x1b0] sm:$0xff] %v1077
        %1174 = vst [vmem:[#allocation2 + $0x1b8] sm:$0xff] %v1078
        %1175 = vst [vmem:[#allocation2 + $0x1c0] sm:$0xff] %v1079
        %1176 = vst [vmem:[#allocation2 + $0x1c8] sm:$0xff] %v1080
        %1177 = vst [vmem:[#allocation2 + $0x1d0] sm:$0xff] %v1081
        %1178 = vst [vmem:[#allocation2 + $0x1d8] sm:$0xff] %v1082
        %1179 = vst [vmem:[#allocation2 + $0x1e0] sm:$0xff] %v1083
        %1180 = vst [vmem:[#allocation2 + $0x1e8] sm:$0xff] %v1084
        %1181 = vst [vmem:[#allocation2 + $0x1f0] sm:$0xff] %v1085
        %1182 = vst [vmem:[#allocation2 + $0x1f8] sm:$0xff] %v1086
        %1183 = vst [vmem:[#allocation2 + $0x200] sm:$0xff] %v1087
        %1184 = vst [vmem:[#allocation2 + $0x208] sm:$0xff] %v1088
        %1185 = vst [vmem:[#allocation2 + $0x210] sm:$0xff] %v1089
        %1186 = vst [vmem:[#allocation2 + $0x218] sm:$0xff] %v1090
        %1187 = vst [vmem:[#allocation2 + $0x220] sm:$0xff] %v1091
        %1188 = vst [vmem:[#allocation2 + $0x228] sm:$0xff] %v1092
        %1189 = vst [vmem:[#allocation2 + $0x230] sm:$0xff] %v1093
        %1190 = vst [vmem:[#allocation2 + $0x238] sm:$0xff] %v1094
        %1191 = vst [vmem:[#allocation2 + $0x240] sm:$0xff] %v1095
        %1192 = vst [vmem:[#allocation2 + $0x248] sm:$0xff] %v1096
        %1193 = vst [vmem:[#allocation2 + $0x250] sm:$0xff] %v1097
        %1194 = vst [vmem:[#allocation2 + $0x258] sm:$0xff] %v1098
        %1195 = vst [vmem:[#allocation2 + $0x260] sm:$0xff] %v1099
        %1196 = vst [vmem:[#allocation2 + $0x268] sm:$0xff] %v1100
        %1197 = vst [vmem:[#allocation2 + $0x270] sm:$0xff] %v1101
        %1198 = vst [vmem:[#allocation2 + $0x278] sm:$0xff] %v1102
        %1199 = vst [vmem:[#allocation2 + $0x280] sm:$0xff] %v1103
        %1200 = vst [vmem:[#allocation2 + $0x288] sm:$0xff] %v1104
        %1201 = vst [vmem:[#allocation2 + $0x290] sm:$0xff] %v1105
        %1202 = vst [vmem:[#allocation2 + $0x298] sm:$0xff] %v1106
        %1203 = vst [vmem:[#allocation2 + $0x2a0] sm:$0xff] %v1107
        %1204 = vst [vmem:[#allocation2 + $0x2a8] sm:$0xff] %v1108
        %1205 = vst [vmem:[#allocation2 + $0x2b0] sm:$0xff] %v1109
        %1206 = vst [vmem:[#allocation2 + $0x2b8] sm:$0xff] %v1110
        %1207 = vst [vmem:[#allocation2 + $0x2c0] sm:$0xff] %v1111
        %1208 = vst [vmem:[#allocation2 + $0x2c8] sm:$0xff] %v1112
        %1209 = vst [vmem:[#allocation2 + $0x2d0] sm:$0xff] %v1113
        %1210 = vst [vmem:[#allocation2 + $0x2d8] sm:$0xff] %v1114
        %1211 = vst [vmem:[#allocation2 + $0x2e0] sm:$0xff] %v1115
        %1212 = vst [vmem:[#allocation2 + $0x2e8] sm:$0xff] %v1116
        %1213 = vst [vmem:[#allocation2 + $0x2f0] sm:$0xff] %v1117
        %1214 = vst [vmem:[#allocation2 + $0x2f8] sm:$0xff] %v1118
        // Predicated region
        $region45: #{tpu_custom_call.1} parent=31 // pred_check
          %p1215 = pneg %p265
        $region46: #{tpu_custom_call.1} parent=31 // pred_check_branch
          %1217 = sbr.rel (%p1215) target = $region48
        $region47: #{tpu_custom_call.1} parent=31 // pred_region
          %v1218 = vld [vmem:[#allocation2] sm:$0xff]
          %v1219 = vld [vmem:[#allocation2 + $0x8] sm:$0xff]
          %v1220 = vld [vmem:[#allocation2 + $0x10] sm:$0xff]
          %v1221 = vld [vmem:[#allocation2 + $0x18] sm:$0xff]
          %v1222 = vld [vmem:[#allocation2 + $0x20] sm:$0xff]
          %v1223 = vld [vmem:[#allocation2 + $0x28] sm:$0xff]
          %v1224 = vld [vmem:[#allocation2 + $0x30] sm:$0xff]
          %v1225 = vld [vmem:[#allocation2 + $0x38] sm:$0xff]
          %v1226 = vld [vmem:[#allocation2 + $0x40] sm:$0xff]
          %v1227 = vld [vmem:[#allocation2 + $0x48] sm:$0xff]
          %v1228 = vld [vmem:[#allocation2 + $0x50] sm:$0xff]
          %v1229 = vld [vmem:[#allocation2 + $0x58] sm:$0xff]
          %v1230 = vld [vmem:[#allocation2 + $0x60] sm:$0xff]
          %v1231 = vld [vmem:[#allocation2 + $0x68] sm:$0xff]
          %v1232 = vld [vmem:[#allocation2 + $0x70] sm:$0xff]
          %v1233 = vld [vmem:[#allocation2 + $0x78] sm:$0xff]
          %v1234 = vld [vmem:[#allocation2 + $0x80] sm:$0xff]
          %v1235 = vld [vmem:[#allocation2 + $0x88] sm:$0xff]
          %v1236 = vld [vmem:[#allocation2 + $0x90] sm:$0xff]
          %v1237 = vld [vmem:[#allocation2 + $0x98] sm:$0xff]
          %v1238 = vld [vmem:[#allocation2 + $0xa0] sm:$0xff]
          %v1239 = vld [vmem:[#allocation2 + $0xa8] sm:$0xff]
          %v1240 = vld [vmem:[#allocation2 + $0xb0] sm:$0xff]
          %v1241 = vld [vmem:[#allocation2 + $0xb8] sm:$0xff]
          %v1242 = vld [vmem:[#allocation2 + $0xc0] sm:$0xff]
          %v1243 = vld [vmem:[#allocation2 + $0xc8] sm:$0xff]
          %v1244 = vld [vmem:[#allocation2 + $0xd0] sm:$0xff]
          %v1245 = vld [vmem:[#allocation2 + $0xd8] sm:$0xff]
          %v1246 = vld [vmem:[#allocation2 + $0xe0] sm:$0xff]
          %v1247 = vld [vmem:[#allocation2 + $0xe8] sm:$0xff]
          %v1248 = vld [vmem:[#allocation2 + $0xf0] sm:$0xff]
          %v1249 = vld [vmem:[#allocation2 + $0xf8] sm:$0xff]
          %v1250 = vld [vmem:[#allocation2 + $0x100] sm:$0xff]
          %v1251 = vld [vmem:[#allocation2 + $0x108] sm:$0xff]
          %v1252 = vld [vmem:[#allocation2 + $0x110] sm:$0xff]
          %v1253 = vld [vmem:[#allocation2 + $0x118] sm:$0xff]
          %v1254 = vld [vmem:[#allocation2 + $0x120] sm:$0xff]
          %v1255 = vld [vmem:[#allocation2 + $0x128] sm:$0xff]
          %v1256 = vld [vmem:[#allocation2 + $0x130] sm:$0xff]
          %v1257 = vld [vmem:[#allocation2 + $0x138] sm:$0xff]
          %v1258 = vld [vmem:[#allocation2 + $0x140] sm:$0xff]
          %v1259 = vld [vmem:[#allocation2 + $0x148] sm:$0xff]
          %v1260 = vld [vmem:[#allocation2 + $0x150] sm:$0xff]
          %v1261 = vld [vmem:[#allocation2 + $0x158] sm:$0xff]
          %v1262 = vld [vmem:[#allocation2 + $0x160] sm:$0xff]
          %v1263 = vld [vmem:[#allocation2 + $0x168] sm:$0xff]
          %v1264 = vld [vmem:[#allocation2 + $0x170] sm:$0xff]
          %v1265 = vld [vmem:[#allocation2 + $0x178] sm:$0xff]
          %v1266 = vld [vmem:[#allocation2 + $0x180] sm:$0xff]
          %v1267 = vld [vmem:[#allocation2 + $0x188] sm:$0xff]
          %v1268 = vld [vmem:[#allocation2 + $0x190] sm:$0xff]
          %v1269 = vld [vmem:[#allocation2 + $0x198] sm:$0xff]
          %v1270 = vld [vmem:[#allocation2 + $0x1a0] sm:$0xff]
          %v1271 = vld [vmem:[#allocation2 + $0x1a8] sm:$0xff]
          %v1272 = vld [vmem:[#allocation2 + $0x1b0] sm:$0xff]
          %v1273 = vld [vmem:[#allocation2 + $0x1b8] sm:$0xff]
          %v1274 = vld [vmem:[#allocation2 + $0x1c0] sm:$0xff]
          %v1275 = vld [vmem:[#allocation2 + $0x1c8] sm:$0xff]
          %v1276 = vld [vmem:[#allocation2 + $0x1d0] sm:$0xff]
          %v1277 = vld [vmem:[#allocation2 + $0x1d8] sm:$0xff]
          %v1278 = vld [vmem:[#allocation2 + $0x1e0] sm:$0xff]
          %v1279 = vld [vmem:[#allocation2 + $0x1e8] sm:$0xff]
          %v1280 = vld [vmem:[#allocation2 + $0x1f0] sm:$0xff]
          %v1281 = vld [vmem:[#allocation2 + $0x1f8] sm:$0xff]
          %v1282 = vld [vmem:[#allocation2 + $0x200] sm:$0xff]
          %v1283 = vld [vmem:[#allocation2 + $0x208] sm:$0xff]
          %v1284 = vld [vmem:[#allocation2 + $0x210] sm:$0xff]
          %v1285 = vld [vmem:[#allocation2 + $0x218] sm:$0xff]
          %v1286 = vld [vmem:[#allocation2 + $0x220] sm:$0xff]
          %v1287 = vld [vmem:[#allocation2 + $0x228] sm:$0xff]
          %v1288 = vld [vmem:[#allocation2 + $0x230] sm:$0xff]
          %v1289 = vld [vmem:[#allocation2 + $0x238] sm:$0xff]
          %v1290 = vld [vmem:[#allocation2 + $0x240] sm:$0xff]
          %v1291 = vld [vmem:[#allocation2 + $0x248] sm:$0xff]
          %v1292 = vld [vmem:[#allocation2 + $0x250] sm:$0xff]
          %v1293 = vld [vmem:[#allocation2 + $0x258] sm:$0xff]
          %v1294 = vld [vmem:[#allocation2 + $0x260] sm:$0xff]
          %v1295 = vld [vmem:[#allocation2 + $0x268] sm:$0xff]
          %v1296 = vld [vmem:[#allocation2 + $0x270] sm:$0xff]
          %v1297 = vld [vmem:[#allocation2 + $0x278] sm:$0xff]
          %v1298 = vld [vmem:[#allocation2 + $0x280] sm:$0xff]
          %v1299 = vld [vmem:[#allocation2 + $0x288] sm:$0xff]
          %v1300 = vld [vmem:[#allocation2 + $0x290] sm:$0xff]
          %v1301 = vld [vmem:[#allocation2 + $0x298] sm:$0xff]
          %v1302 = vld [vmem:[#allocation2 + $0x2a0] sm:$0xff]
          %v1303 = vld [vmem:[#allocation2 + $0x2a8] sm:$0xff]
          %v1304 = vld [vmem:[#allocation2 + $0x2b0] sm:$0xff]
          %v1305 = vld [vmem:[#allocation2 + $0x2b8] sm:$0xff]
          %v1306 = vld [vmem:[#allocation2 + $0x2c0] sm:$0xff]
          %v1307 = vld [vmem:[#allocation2 + $0x2c8] sm:$0xff]
          %v1308 = vld [vmem:[#allocation2 + $0x2d0] sm:$0xff]
          %v1309 = vld [vmem:[#allocation2 + $0x2d8] sm:$0xff]
          %v1310 = vld [vmem:[#allocation2 + $0x2e0] sm:$0xff]
          %v1311 = vld [vmem:[#allocation2 + $0x2e8] sm:$0xff]
          %v1312 = vld [vmem:[#allocation2 + $0x2f0] sm:$0xff]
          %v1313 = vld [vmem:[#allocation2 + $0x2f8] sm:$0xff]
          %v1314 = vld [vmem:[%s261] sm:$0x7]
          %v1316 = vlaneseq
          %v1317 = vshrl.u32 %v1316, 7
          %v1318 = vsub.s32 0, %v1317
          %v1319 = vrot.slane %v1314, %v1318
          %v1320 = vlaneseq
          %v1321 = vshrl.u32 %v1320, 7
          %v1322 = vsub.s32 1, %v1321
          %v1323 = vrot.slane %v1314, %v1322
          %v1324 = vlaneseq
          %v1325 = vshrl.u32 %v1324, 7
          %v1326 = vsub.s32 2, %v1325
          %v1327 = vrot.slane %v1314, %v1326
          %v1331 = vadd.f32 %v1218, %v1319
          %v1332 = vadd.f32 %v1219, %v1323
          %v1333 = vadd.f32 %v1220, %v1327
          %v1334 = vadd.f32 %v1221, %v1319
          %v1335 = vadd.f32 %v1222, %v1323
          %v1336 = vadd.f32 %v1223, %v1327
          %v1337 = vadd.f32 %v1224, %v1319
          %v1338 = vadd.f32 %v1225, %v1323
          %v1339 = vadd.f32 %v1226, %v1327
          %v1340 = vadd.f32 %v1227, %v1319
          %v1341 = vadd.f32 %v1228, %v1323
          %v1342 = vadd.f32 %v1229, %v1327
          %v1343 = vadd.f32 %v1230, %v1319
          %v1344 = vadd.f32 %v1231, %v1323
          %v1345 = vadd.f32 %v1232, %v1327
          %v1346 = vadd.f32 %v1233, %v1319
          %v1347 = vadd.f32 %v1234, %v1323
          %v1348 = vadd.f32 %v1235, %v1327
          %v1349 = vadd.f32 %v1236, %v1319
          %v1350 = vadd.f32 %v1237, %v1323
          %v1351 = vadd.f32 %v1238, %v1327
          %v1352 = vadd.f32 %v1239, %v1319
          %v1353 = vadd.f32 %v1240, %v1323
          %v1354 = vadd.f32 %v1241, %v1327
          %v1355 = vadd.f32 %v1242, %v1319
          %v1356 = vadd.f32 %v1243, %v1323
          %v1357 = vadd.f32 %v1244, %v1327
          %v1358 = vadd.f32 %v1245, %v1319
          %v1359 = vadd.f32 %v1246, %v1323
          %v1360 = vadd.f32 %v1247, %v1327
          %v1361 = vadd.f32 %v1248, %v1319
          %v1362 = vadd.f32 %v1249, %v1323
          %v1363 = vadd.f32 %v1250, %v1327
          %v1364 = vadd.f32 %v1251, %v1319
          %v1365 = vadd.f32 %v1252, %v1323
          %v1366 = vadd.f32 %v1253, %v1327
          %v1367 = vadd.f32 %v1254, %v1319
          %v1368 = vadd.f32 %v1255, %v1323
          %v1369 = vadd.f32 %v1256, %v1327
          %v1370 = vadd.f32 %v1257, %v1319
          %v1371 = vadd.f32 %v1258, %v1323
          %v1372 = vadd.f32 %v1259, %v1327
          %v1373 = vadd.f32 %v1260, %v1319
          %v1374 = vadd.f32 %v1261, %v1323
          %v1375 = vadd.f32 %v1262, %v1327
          %v1376 = vadd.f32 %v1263, %v1319
          %v1377 = vadd.f32 %v1264, %v1323
          %v1378 = vadd.f32 %v1265, %v1327
          %v1379 = vadd.f32 %v1266, %v1319
          %v1380 = vadd.f32 %v1267, %v1323
          %v1381 = vadd.f32 %v1268, %v1327
          %v1382 = vadd.f32 %v1269, %v1319
          %v1383 = vadd.f32 %v1270, %v1323
          %v1384 = vadd.f32 %v1271, %v1327
          %v1385 = vadd.f32 %v1272, %v1319
          %v1386 = vadd.f32 %v1273, %v1323
          %v1387 = vadd.f32 %v1274, %v1327
          %v1388 = vadd.f32 %v1275, %v1319
          %v1389 = vadd.f32 %v1276, %v1323
          %v1390 = vadd.f32 %v1277, %v1327
          %v1391 = vadd.f32 %v1278, %v1319
          %v1392 = vadd.f32 %v1279, %v1323
          %v1393 = vadd.f32 %v1280, %v1327
          %v1394 = vadd.f32 %v1281, %v1319
          %v1395 = vadd.f32 %v1282, %v1323
          %v1396 = vadd.f32 %v1283, %v1327
          %v1397 = vadd.f32 %v1284, %v1319
          %v1398 = vadd.f32 %v1285, %v1323
          %v1399 = vadd.f32 %v1286, %v1327
          %v1400 = vadd.f32 %v1287, %v1319
          %v1401 = vadd.f32 %v1288, %v1323
          %v1402 = vadd.f32 %v1289, %v1327
          %v1403 = vadd.f32 %v1290, %v1319
          %v1404 = vadd.f32 %v1291, %v1323
          %v1405 = vadd.f32 %v1292, %v1327
          %v1406 = vadd.f32 %v1293, %v1319
          %v1407 = vadd.f32 %v1294, %v1323
          %v1408 = vadd.f32 %v1295, %v1327
          %v1409 = vadd.f32 %v1296, %v1319
          %v1410 = vadd.f32 %v1297, %v1323
          %v1411 = vadd.f32 %v1298, %v1327
          %v1412 = vadd.f32 %v1299, %v1319
          %v1413 = vadd.f32 %v1300, %v1323
          %v1414 = vadd.f32 %v1301, %v1327
          %v1415 = vadd.f32 %v1302, %v1319
          %v1416 = vadd.f32 %v1303, %v1323
          %v1417 = vadd.f32 %v1304, %v1327
          %v1418 = vadd.f32 %v1305, %v1319
          %v1419 = vadd.f32 %v1306, %v1323
          %v1420 = vadd.f32 %v1307, %v1327
          %v1421 = vadd.f32 %v1308, %v1319
          %v1422 = vadd.f32 %v1309, %v1323
          %v1423 = vadd.f32 %v1310, %v1327
          %v1424 = vadd.f32 %v1311, %v1319
          %v1425 = vadd.f32 %v1312, %v1323
          %v1426 = vadd.f32 %v1313, %v1327
          %1427 = vst [vmem:[%s254] sm:$0xff] %v1331
          %1428 = vst [vmem:[%s254 + $0x8] sm:$0xff] %v1332
          %1429 = vst [vmem:[%s254 + $0x10] sm:$0xff] %v1333
          %1430 = vst [vmem:[%s254 + $0x18] sm:$0xff] %v1334
          %1431 = vst [vmem:[%s254 + $0x20] sm:$0xff] %v1335
          %1432 = vst [vmem:[%s254 + $0x28] sm:$0xff] %v1336
          %1433 = vst [vmem:[%s254 + $0x30] sm:$0xff] %v1337
          %1434 = vst [vmem:[%s254 + $0x38] sm:$0xff] %v1338
          %1435 = vst [vmem:[%s254 + $0x40] sm:$0xff] %v1339
          %1436 = vst [vmem:[%s254 + $0x48] sm:$0xff] %v1340
          %1437 = vst [vmem:[%s254 + $0x50] sm:$0xff] %v1341
          %1438 = vst [vmem:[%s254 + $0x58] sm:$0xff] %v1342
          %1439 = vst [vmem:[%s254 + $0x60] sm:$0xff] %v1343
          %1440 = vst [vmem:[%s254 + $0x68] sm:$0xff] %v1344
          %1441 = vst [vmem:[%s254 + $0x70] sm:$0xff] %v1345
          %1442 = vst [vmem:[%s254 + $0x78] sm:$0xff] %v1346
          %1443 = vst [vmem:[%s254 + $0x80] sm:$0xff] %v1347
          %1444 = vst [vmem:[%s254 + $0x88] sm:$0xff] %v1348
          %1445 = vst [vmem:[%s254 + $0x90] sm:$0xff] %v1349
          %1446 = vst [vmem:[%s254 + $0x98] sm:$0xff] %v1350
          %1447 = vst [vmem:[%s254 + $0xa0] sm:$0xff] %v1351
          %1448 = vst [vmem:[%s254 + $0xa8] sm:$0xff] %v1352
          %1449 = vst [vmem:[%s254 + $0xb0] sm:$0xff] %v1353
          %1450 = vst [vmem:[%s254 + $0xb8] sm:$0xff] %v1354
          %1451 = vst [vmem:[%s254 + $0xc0] sm:$0xff] %v1355
          %1452 = vst [vmem:[%s254 + $0xc8] sm:$0xff] %v1356
          %1453 = vst [vmem:[%s254 + $0xd0] sm:$0xff] %v1357
          %1454 = vst [vmem:[%s254 + $0xd8] sm:$0xff] %v1358
          %1455 = vst [vmem:[%s254 + $0xe0] sm:$0xff] %v1359
          %1456 = vst [vmem:[%s254 + $0xe8] sm:$0xff] %v1360
          %1457 = vst [vmem:[%s254 + $0xf0] sm:$0xff] %v1361
          %1458 = vst [vmem:[%s254 + $0xf8] sm:$0xff] %v1362
          %1459 = vst [vmem:[%s254 + $0x100] sm:$0xff] %v1363
          %1460 = vst [vmem:[%s254 + $0x108] sm:$0xff] %v1364
          %1461 = vst [vmem:[%s254 + $0x110] sm:$0xff] %v1365
          %1462 = vst [vmem:[%s254 + $0x118] sm:$0xff] %v1366
          %1463 = vst [vmem:[%s254 + $0x120] sm:$0xff] %v1367
          %1464 = vst [vmem:[%s254 + $0x128] sm:$0xff] %v1368
          %1465 = vst [vmem:[%s254 + $0x130] sm:$0xff] %v1369
          %1466 = vst [vmem:[%s254 + $0x138] sm:$0xff] %v1370
          %1467 = vst [vmem:[%s254 + $0x140] sm:$0xff] %v1371
          %1468 = vst [vmem:[%s254 + $0x148] sm:$0xff] %v1372
          %1469 = vst [vmem:[%s254 + $0x150] sm:$0xff] %v1373
          %1470 = vst [vmem:[%s254 + $0x158] sm:$0xff] %v1374
          %1471 = vst [vmem:[%s254 + $0x160] sm:$0xff] %v1375
          %1472 = vst [vmem:[%s254 + $0x168] sm:$0xff] %v1376
          %1473 = vst [vmem:[%s254 + $0x170] sm:$0xff] %v1377
          %1474 = vst [vmem:[%s254 + $0x178] sm:$0xff] %v1378
          %1475 = vst [vmem:[%s254 + $0x180] sm:$0xff] %v1379
          %1476 = vst [vmem:[%s254 + $0x188] sm:$0xff] %v1380
          %1477 = vst [vmem:[%s254 + $0x190] sm:$0xff] %v1381
          %1478 = vst [vmem:[%s254 + $0x198] sm:$0xff] %v1382
          %1479 = vst [vmem:[%s254 + $0x1a0] sm:$0xff] %v1383
          %1480 = vst [vmem:[%s254 + $0x1a8] sm:$0xff] %v1384
          %1481 = vst [vmem:[%s254 + $0x1b0] sm:$0xff] %v1385
          %1482 = vst [vmem:[%s254 + $0x1b8] sm:$0xff] %v1386
          %1483 = vst [vmem:[%s254 + $0x1c0] sm:$0xff] %v1387
          %1484 = vst [vmem:[%s254 + $0x1c8] sm:$0xff] %v1388
          %1485 = vst [vmem:[%s254 + $0x1d0] sm:$0xff] %v1389
          %1486 = vst [vmem:[%s254 + $0x1d8] sm:$0xff] %v1390
          %1487 = vst [vmem:[%s254 + $0x1e0] sm:$0xff] %v1391
          %1488 = vst [vmem:[%s254 + $0x1e8] sm:$0xff] %v1392
          %1489 = vst [vmem:[%s254 + $0x1f0] sm:$0xff] %v1393
          %1490 = vst [vmem:[%s254 + $0x1f8] sm:$0xff] %v1394
          %1491 = vst [vmem:[%s254 + $0x200] sm:$0xff] %v1395
          %1492 = vst [vmem:[%s254 + $0x208] sm:$0xff] %v1396
          %1493 = vst [vmem:[%s254 + $0x210] sm:$0xff] %v1397
          %1494 = vst [vmem:[%s254 + $0x218] sm:$0xff] %v1398
          %1495 = vst [vmem:[%s254 + $0x220] sm:$0xff] %v1399
          %1496 = vst [vmem:[%s254 + $0x228] sm:$0xff] %v1400
          %1497 = vst [vmem:[%s254 + $0x230] sm:$0xff] %v1401
          %1498 = vst [vmem:[%s254 + $0x238] sm:$0xff] %v1402
          %1499 = vst [vmem:[%s254 + $0x240] sm:$0xff] %v1403
          %1500 = vst [vmem:[%s254 + $0x248] sm:$0xff] %v1404
          %1501 = vst [vmem:[%s254 + $0x250] sm:$0xff] %v1405
          %1502 = vst [vmem:[%s254 + $0x258] sm:$0xff] %v1406
          %1503 = vst [vmem:[%s254 + $0x260] sm:$0xff] %v1407
          %1504 = vst [vmem:[%s254 + $0x268] sm:$0xff] %v1408
          %1505 = vst [vmem:[%s254 + $0x270] sm:$0xff] %v1409
          %1506 = vst [vmem:[%s254 + $0x278] sm:$0xff] %v1410
          %1507 = vst [vmem:[%s254 + $0x280] sm:$0xff] %v1411
          %1508 = vst [vmem:[%s254 + $0x288] sm:$0xff] %v1412
          %1509 = vst [vmem:[%s254 + $0x290] sm:$0xff] %v1413
          %1510 = vst [vmem:[%s254 + $0x298] sm:$0xff] %v1414
          %1511 = vst [vmem:[%s254 + $0x2a0] sm:$0xff] %v1415
          %1512 = vst [vmem:[%s254 + $0x2a8] sm:$0xff] %v1416
          %1513 = vst [vmem:[%s254 + $0x2b0] sm:$0xff] %v1417
          %1514 = vst [vmem:[%s254 + $0x2b8] sm:$0xff] %v1418
          %1515 = vst [vmem:[%s254 + $0x2c0] sm:$0xff] %v1419
          %1516 = vst [vmem:[%s254 + $0x2c8] sm:$0xff] %v1420
          %1517 = vst [vmem:[%s254 + $0x2d0] sm:$0xff] %v1421
          %1518 = vst [vmem:[%s254 + $0x2d8] sm:$0xff] %v1422
          %1519 = vst [vmem:[%s254 + $0x2e0] sm:$0xff] %v1423
          %1520 = vst [vmem:[%s254 + $0x2e8] sm:$0xff] %v1424
          %1521 = vst [vmem:[%s254 + $0x2f0] sm:$0xff] %v1425
          %1522 = vst [vmem:[%s254 + $0x2f8] sm:$0xff] %v1426
        $region48: #{tpu_custom_call.1} parent=31 // pred_fallthru
          _
        %s1523 = sand.u32 %s132, 1
        %s1524 = scalar_lea.sflag [#allocation5], %s1523
        %s1525 = sand.u32 %s132, 1
        %s1526 = smul.addr %s1525, 768
        %s1527 = scalar_lea.vmem [#allocation8], %s1526
        // Predicated region
        $region49: #{tpu_custom_call.1} parent=31 // pred_check
          %p1528 = pneg %p142
        $region50: #{tpu_custom_call.1} parent=31 // pred_check_branch
          %1530 = sbr.rel (%p1528) target = $region52
        $region51: #{tpu_custom_call.1} parent=31 // pred_region
          %s1531 = smul.u32 32, %s26
          %s1532 = smul.u32 3, %s27
          %s1534 = ssub.s32 12288, 12288
          %1535 = vsyncadd %s1524, %s1534
          %s1536 = smul.addr %s1531, 3
          %s1537 = sadd.s32 %s1532, %s1536
          %s1538 = smul.addr %s1537, 128
          %s1539 = scalar_lea.hbm %s3, %s1538
          %s1540 = sshll.u32 %s1527, 4
          %s1541 = int_to_ptr.vmem [resolvable:$true] %s1540
          %1546 = dma.vmem_to_hbm [thread:$0]  %s1541, 12288, %s1539, %s1524, 384, 384, 24
        $region52: #{tpu_custom_call.1} parent=31 // pred_fallthru
          _
      $region32: #{tpu_custom_call.1} parent=5 // pred_fallthru
        _
      %p1547 = scmp.le.s32.totalorder 2, %s16
      // Predicated region
      $region53: #{tpu_custom_call.1} parent=5 // pred_check
        %p1548 = pneg %p1547
      $region54: #{tpu_custom_call.1} parent=5 // pred_check_branch
        %1550 = sbr.rel (%p1548) target = $region56
      $region55: #{tpu_custom_call.1} parent=5 // pred_region
        %s1551 = ssub.s32 %s16, 2
        // Predicated region
        $region57: #{tpu_custom_call.1} parent=55 // pred_check
          %p1552 = pneg %p148
        $region58: #{tpu_custom_call.1} parent=55 // pred_check_branch
          %1554 = sbr.rel (%p1552) target = $region60
        $region59: #{tpu_custom_call.1} parent=55 // pred_region
          %s1555 = sand.u32 %s133, 1
          %s1556 = scalar_lea.sflag [#allocation5], %s1555
          %s1557 = sand.u32 %s133, 1
          %s1558 = smul.addr %s1557, 768
          %s1559 = scalar_lea.vmem [#allocation8], %s1558
          %1560 = dma.done %s1556, 12288
        $region60: #{tpu_custom_call.1} parent=55 // pred_fallthru
          _
      $region56: #{tpu_custom_call.1} parent=5 // pred_fallthru
        _
    $region6: #{tpu_custom_call.1} parent=1 // loop_footer
      %s20 = sadd.s32 1, %s16
    $region7: #{tpu_custom_call.1} parent=1 // loop_footer_branch
      %15 = sbr.rel target = $region3
    $region8: #{tpu_custom_call.1} parent=1 // loop_exit
      _
    %1561 = vsyncpa [#allocation4], 1
    %s1562 = scalar_lea.sflag [#allocation4], 1
    %1563 = vsyncpa %s1562, 1
    %1564 = vsyncpa [#allocation7], 1
    %1565 = vsyncpa [#allocation5], 1
    %s1566 = scalar_lea.sflag [#allocation5], 1
    %1567 = vsyncpa %s1566, 1

</llo_original>
